<compile_context>
chip_gen: v7x
topology: tpu7x:2x2x1
jax: 0.10.0
libtpu: 0.0.40
codegen_flags: <defaults>
</compile_context>

<pallas_src>
import math

import jax
import jax.numpy as jnp
from jax.experimental import pallas as pl
from jax.experimental.pallas import tpu as pltpu


def _round_up(x, m):
    return ((x + m - 1) // m) * m


def _spec(shape):
    """Whole-array block (grid=(1,)) — block_shape equals the full array dims,
    so the (8,128) divisibility rule does not apply."""
    nd = len(shape)
    return pl.BlockSpec(shape, lambda i, nd=nd: (0,) * nd)


# ---------------------------------------------------------------------------
# Fused Pallas kernel: embedding + n_layers GRU cells + decoder Linear
# ---------------------------------------------------------------------------
def charrnn_step_kernel(tok_ref, emb_ref, wih_ref, whh_ref,
                        brz_ref, bin_ref, bhn_ref, wdec_ref, bdec_ref,
                        h_in_ref, logits_ref, hout_ref):
    Vp, Hp = emb_ref.shape          # padded vocab / hidden (multiples of 128)
    Bp = tok_ref.shape[0]           # padded batch (multiple of 8)
    L = h_in_ref.shape[0]           # static number of layers

    # ---- embedding lookup as one-hot @ table (MXU) ------------------------
    tok = tok_ref[...]                                          # (Bp, 1) int32
    vocab_ids = jax.lax.broadcasted_iota(jnp.int32, (Bp, Vp), 1)
    onehot = (vocab_ids == tok).astype(jnp.float32)             # (Bp, Vp)
    x = jnp.dot(onehot, emb_ref[...],
                preferred_element_type=jnp.float32)             # (Bp, Hp)

    # ---- stacked GRU cells (PyTorch gate order r, z, n) --------------------
    # Gate blocks in wih/whh columns are at 128-aligned offsets [0, Hp, 2Hp].
    for l in range(L):
        h = h_in_ref[l]                                         # (Bp, Hp)
        gi = jnp.dot(x, wih_ref[l], preferred_element_type=jnp.float32)
        gh = jnp.dot(h, whh_ref[l], preferred_element_type=jnp.float32)

        rz = jax.nn.sigmoid(gi[:, :2 * Hp] + gh[:, :2 * Hp] + brz_ref[l])
        r = rz[:, :Hp]
        z = rz[:, Hp:]
        n = jnp.tanh(gi[:, 2 * Hp:] + bin_ref[l]
                     + r * (gh[:, 2 * Hp:] + bhn_ref[l]))
        h_new = (1.0 - z) * n + z * h

        hout_ref[l] = h_new         # write directly into (L, Bp, Hp) output
        x = h_new                   # eval mode: no inter-layer dropout

    # ---- decoder Linear -----------------------------------------------------
    logits_ref[...] = (jnp.dot(x, wdec_ref[...],
                               preferred_element_type=jnp.float32)
                       + bdec_ref[...])


# ---------------------------------------------------------------------------
# CharRNN (GRU) module in JAX, compute in a single Pallas kernel
# ---------------------------------------------------------------------------
class CharRNNPallas:
    def __init__(self, input_size, hidden_size, output_size,
                 model_type="gru", n_layers=1, key=None):
        self.model_type = model_type.lower()
        if self.model_type != "gru":
            # TODO(synk): LSTM variant not implemented; GRU path only.
            raise NotImplementedError("Only 'gru' model_type is implemented")
        self.input_size = input_size
        self.hidden_size = hidden_size
        self.output_size = output_size
        self.n_layers = n_layers

        V, H, O, L = input_size, hidden_size, output_size, n_layers
        Hp = _round_up(H, 128)
        Vp = _round_up(V, 128)
        Op = _round_up(O, 128)
        self._Hp, self._Vp, self._Op = Hp, Vp, Op

        if key is None:
            key = jax.random.PRNGKey(0)
        k = 1.0 / math.sqrt(H)
        keys = jax.random.split(key, 3 + 4 * L)
        ki = iter(keys)

        # ---- raw parameters in PyTorch conventions (kept for reference) ----
        emb = jax.random.normal(next(ki), (V, H), jnp.float32)       # N(0,1)
        w_ih, w_hh, b_ih, b_hh = [], [], [], []
        for _ in range(L):
            w_ih.append(jax.random.uniform(next(ki), (3 * H, H), jnp.float32, -k, k))
            w_hh.append(jax.random.uniform(next(ki), (3 * H, H), jnp.float32, -k, k))
            b_ih.append(jax.random.uniform(next(ki), (3 * H,), jnp.float32, -k, k))
            b_hh.append(jax.random.uniform(next(ki), (3 * H,), jnp.float32, -k, k))
        w_dec = jax.random.uniform(next(ki), (O, H), jnp.float32, -k, k)
        b_dec = jax.random.uniform(next(ki), (O,), jnp.float32, -k, k)
        self._raw = dict(emb=emb, w_ih=w_ih, w_hh=w_hh,
                         b_ih=b_ih, b_hh=b_hh, w_dec=w_dec, b_dec=b_dec)

        # ---- packed, pre-transposed, lane-padded parameters -----------------
        self.emb_p = jnp.zeros((Vp, Hp), jnp.float32).at[:V, :H].set(emb)

        wih_p, whh_p, brz_p, bin_p, bhn_p = [], [], [], [], []
        for l in range(L):
            wt_i = w_ih[l].T            # (H, 3H): gate columns r | z | n
            wt_h = w_hh[l].T
            wi = jnp.zeros((Hp, 3 * Hp), jnp.float32)
            wh = jnp.zeros((Hp, 3 * Hp), jnp.float32)
            for g in range(3):          # place each gate at a 128-aligned block
                wi = wi.at[:H, g * Hp:g * Hp + H].set(wt_i[:, g * H:(g + 1) * H])
                wh = wh.at[:H, g * Hp:g * Hp + H].set(wt_h[:, g * H:(g + 1) * H])
            wih_p.append(wi)
            whh_p.append(wh)

            # fold b_ih + b_hh for r and z gates; keep n-gate biases separate
            brz = jnp.zeros((1, 2 * Hp), jnp.float32)
            brz = brz.at[0, :H].set(b_ih[l][:H] + b_hh[l][:H])
            brz = brz.at[0, Hp:Hp + H].set(b_ih[l][H:2 * H] + b_hh[l][H:2 * H])
            brz_p.append(brz)
            bin_p.append(jnp.zeros((1, Hp), jnp.float32).at[0, :H].set(b_ih[l][2 * H:]))
            bhn_p.append(jnp.zeros((1, Hp), jnp.float32).at[0, :H].set(b_hh[l][2 * H:]))

        self.wih_p = jnp.stack(wih_p)        # (L, Hp, 3Hp)
        self.whh_p = jnp.stack(whh_p)        # (L, Hp, 3Hp)
        self.brz_p = jnp.stack(brz_p)        # (L, 1, 2Hp)
        self.bin_p = jnp.stack(bin_p)        # (L, 1, Hp)
        self.bhn_p = jnp.stack(bhn_p)        # (L, 1, Hp)

        self.wdec_p = jnp.zeros((Hp, Op), jnp.float32).at[:H, :O].set(w_dec.T)
        self.bdec_p = jnp.zeros((1, Op), jnp.float32).at[0, :O].set(b_dec)

        self._call_cache = {}                # padded-batch -> pallas callable

    # -----------------------------------------------------------------------
    def init_hidden(self, batch_size):
        return jnp.zeros((self.n_layers, batch_size, self.hidden_size),
                         jnp.float32)

    def _get_call(self, Bp):
        if Bp in self._call_cache:
            return self._call_cache[Bp]
        L, Hp, Vp, Op = self.n_layers, self._Hp, self._Vp, self._Op
        call = pl.pallas_call(
            charrnn_step_kernel,
            out_shape=(jax.ShapeDtypeStruct((Bp, Op), jnp.float32),
                       jax.ShapeDtypeStruct((L, Bp, Hp), jnp.float32)),
            grid=(1,),
            in_specs=[
                _spec((Bp, 1)),              # token ids
                _spec((Vp, Hp)),             # embedding table
                _spec((L, Hp, 3 * Hp)),      # W_ih (pre-transposed, gate-padded)
                _spec((L, Hp, 3 * Hp)),      # W_hh
                _spec((L, 1, 2 * Hp)),       # folded r/z bias
                _spec((L, 1, Hp)),           # b_in (n gate, input side)
                _spec((L, 1, Hp)),           # b_hn (n gate, hidden side)
                _spec((Hp, Op)),             # decoder weight (pre-transposed)
                _spec((1, Op)),              # decoder bias
                _spec((L, Bp, Hp)),          # hidden in
            ],
            out_specs=(_spec((Bp, Op)), _spec((L, Bp, Hp))),
            compiler_params=pltpu.CompilerParams(
                dimension_semantics=("arbitrary",)),
        )
        self._call_cache[Bp] = call
        return call

    def forward(self, inp, hidden):
        """inp: (batch,) int token ids; hidden: (n_layers, batch, hidden)."""
        B = inp.shape[0]
        L, H, O = self.n_layers, self.hidden_size, self.output_size
        Hp = self._Hp
        Bp = _round_up(max(B, 1), 8)

        tok = jnp.zeros((Bp, 1), jnp.int32).at[:B, 0].set(inp.astype(jnp.int32))
        h_p = jnp.zeros((L, Bp, Hp), jnp.float32).at[:, :B, :H].set(
            hidden.astype(jnp.float32))

        logits_p, h_out_p = self._get_call(Bp)(
            tok, self.emb_p, self.wih_p, self.whh_p,
            self.brz_p, self.bin_p, self.bhn_p,
            self.wdec_p, self.bdec_p, h_p)

        return logits_p[:B, :O], h_out_p[:, :B, :H]

    # -----------------------------------------------------------------------
    def reference_forward(self, inp, hidden):
        """Pure-JAX reference (same math, unpadded params) for validation."""
        H, L = self.hidden_size, self.n_layers
        r_ = self._raw
        x = r_["emb"][inp]
        new_h = []
        for l in range(L):
            h = hidden[l]
            gi = x @ r_["w_ih"][l].T + r_["b_ih"][l]
            gh = h @ r_["w_hh"][l].T + r_["b_hh"][l]
            r = jax.nn.sigmoid(gi[:, :H] + gh[:, :H])
            z = jax.nn.sigmoid(gi[:, H:2 * H] + gh[:, H:2 * H])
            n = jnp.tanh(gi[:, 2 * H:] + r * gh[:, 2 * H:])
            h_new = (1.0 - z) * n + z * h
            new_h.append(h_new)
            x = h_new
        logits = x @ r_["w_dec"].T + r_["b_dec"]
        return logits, jnp.stack(new_h, axis=0)


# ---------------------------------------------------------------------------
if __name__ == "__main__":
    input_size = 16     # vocab size
    hidden_size = 32
    output_size = 16
    batch_size = 8
    n_layers = 2

    model = CharRNNPallas(input_size, hidden_size, output_size,
                          model_type="gru", n_layers=n_layers,
                          key=jax.random.PRNGKey(0))

    tokens = jax.random.randint(jax.random.PRNGKey(0), (batch_size,),
                                0, input_size, dtype=jnp.int32)
    hidden0 = model.init_hidden(batch_size)

    # step 1
    logits, hidden1 = model.forward(tokens, hidden0)
    jax.block_until_ready((logits, hidden1))
    assert logits.shape == (batch_size, output_size)
    assert hidden1.shape == (n_layers, batch_size, hidden_size)

    ref_logits, ref_hidden = model.reference_forward(tokens, hidden0)
    assert float(jnp.max(jnp.abs(logits - ref_logits))) < 1e-4
    assert float(jnp.max(jnp.abs(hidden1 - ref_hidden))) < 1e-4

    # step 2 (exercise hidden-state round trip)
    logits2, hidden2 = model.forward(tokens, hidden1)
    jax.block_until_ready((logits2, hidden2))
    ref_logits2, ref_hidden2 = model.reference_forward(tokens, ref_hidden)
    assert float(jnp.max(jnp.abs(logits2 - ref_logits2))) < 1e-4
    assert float(jnp.max(jnp.abs(hidden2 - ref_hidden2))) < 1e-4

    print("KERNEL_OK")
</pallas_src>

<mosaic_0001>
module attributes {stable_mosaic.version = 11 : i64} {
  func.func @charrnn_step_kernel(%arg0: i32, %arg1: memref<8x1xi32, #tpu.memory_space<vmem>>, %arg2: memref<128x128xf32, #tpu.memory_space<vmem>>, %arg3: memref<2x128x384xf32, #tpu.memory_space<vmem>>, %arg4: memref<2x128x384xf32, #tpu.memory_space<vmem>>, %arg5: memref<2x1x256xf32, #tpu.memory_space<vmem>>, %arg6: memref<2x1x128xf32, #tpu.memory_space<vmem>>, %arg7: memref<2x1x128xf32, #tpu.memory_space<vmem>>, %arg8: memref<128x128xf32, #tpu.memory_space<vmem>>, %arg9: memref<1x128xf32, #tpu.memory_space<vmem>>, %arg10: memref<2x8x128xf32, #tpu.memory_space<vmem>>, %arg11: memref<8x128xf32, #tpu.memory_space<vmem>>, %arg12: memref<2x8x128xf32, #tpu.memory_space<vmem>>) attributes {dimension_semantics = [#tpu.dimension_semantics<arbitrary>], iteration_bounds = array<i64: 1>, scalar_prefetch = 0 : i64, scratch_operands = 0 : i64, tpu.core_type = #tpu.core_type<tc>, window_params = [{pipeline_mode = #tpu.pipeline_mode<synchronous>, transform_indices = @transform_0, window_bounds = array<i64: 8, 1>}, {pipeline_mode = #tpu.pipeline_mode<synchronous>, transform_indices = @transform_1, window_bounds = array<i64: 128, 128>}, {pipeline_mode = #tpu.pipeline_mode<synchronous>, transform_indices = @transform_2, window_bounds = array<i64: 2, 128, 384>}, {pipeline_mode = #tpu.pipeline_mode<synchronous>, transform_indices = @transform_3, window_bounds = array<i64: 2, 128, 384>}, {pipeline_mode = #tpu.pipeline_mode<synchronous>, transform_indices = @transform_4, window_bounds = array<i64: 2, 1, 256>}, {pipeline_mode = #tpu.pipeline_mode<synchronous>, transform_indices = @transform_5, window_bounds = array<i64: 2, 1, 128>}, {pipeline_mode = #tpu.pipeline_mode<synchronous>, transform_indices = @transform_6, window_bounds = array<i64: 2, 1, 128>}, {pipeline_mode = #tpu.pipeline_mode<synchronous>, transform_indices = @transform_7, window_bounds = array<i64: 128, 128>}, {pipeline_mode = #tpu.pipeline_mode<synchronous>, transform_indices = @transform_8, window_bounds = array<i64: 1, 128>}, {pipeline_mode = #tpu.pipeline_mode<synchronous>, transform_indices = @transform_9, window_bounds = array<i64: 2, 8, 128>}, {pipeline_mode = #tpu.pipeline_mode<synchronous>, transform_indices = @transform_10, window_bounds = array<i64: 8, 128>}, {pipeline_mode = #tpu.pipeline_mode<synchronous>, transform_indices = @transform_11, window_bounds = array<i64: 2, 8, 128>}]} {
    %c0 = arith.constant 0 : index
    %c0_0 = arith.constant 0 : index
    %0 = vector.load %arg1[%c0, %c0_0] : memref<8x1xi32, #tpu.memory_space<vmem>>, vector<8x1xi32>
    %1 = tpu.iota {dimensions = array<i32: 1>} : vector<8x128xi32>
    %2 = vector.broadcast %0 : vector<8x1xi32> to vector<8x128xi32>
    %3 = arith.cmpi eq, %1, %2 : vector<8x128xi32>
    %4 = arith.extui %3 : vector<8x128xi1> to vector<8x128xi32>
    %5 = arith.sitofp %4 : vector<8x128xi32> to vector<8x128xf32>
    %c0_1 = arith.constant 0 : index
    %c0_2 = arith.constant 0 : index
    %6 = vector.load %arg2[%c0_1, %c0_2] : memref<128x128xf32, #tpu.memory_space<vmem>>, vector<128x128xf32>
    %cst = arith.constant dense<0.000000e+00> : vector<8x128xf32>
    %7 = tpu.matmul %5, %6, %cst {dimension_numbers = #tpu.dot_dimension_numbers<[1], [0], [0], [1], [0, 0, 1, 1], [], []>} : vector<8x128xf32>, vector<128x128xf32>, vector<8x128xf32> -> vector<8x128xf32>
    %c0_3 = arith.constant 0 : index
    %c0_4 = arith.constant 0 : index
    %c0_5 = arith.constant 0 : index
    %8 = vector.load %arg10[%c0_3, %c0_4, %c0_5] : memref<2x8x128xf32, #tpu.memory_space<vmem>>, vector<1x8x128xf32>
    %9 = vector.shape_cast %8 : vector<1x8x128xf32> to vector<8x128xf32>
    %c0_6 = arith.constant 0 : index
    %c0_7 = arith.constant 0 : index
    %c0_8 = arith.constant 0 : index
    %10 = vector.load %arg3[%c0_6, %c0_7, %c0_8] : memref<2x128x384xf32, #tpu.memory_space<vmem>>, vector<1x128x384xf32>
    %11 = vector.shape_cast %10 : vector<1x128x384xf32> to vector<128x384xf32>
    %cst_9 = arith.constant dense<0.000000e+00> : vector<8x384xf32>
    %12 = tpu.matmul %7, %11, %cst_9 {dimension_numbers = #tpu.dot_dimension_numbers<[1], [0], [0], [1], [0, 0, 1, 1], [], []>} : vector<8x128xf32>, vector<128x384xf32>, vector<8x384xf32> -> vector<8x384xf32>
    %c0_10 = arith.constant 0 : index
    %c0_11 = arith.constant 0 : index
    %c0_12 = arith.constant 0 : index
    %13 = vector.load %arg4[%c0_10, %c0_11, %c0_12] : memref<2x128x384xf32, #tpu.memory_space<vmem>>, vector<1x128x384xf32>
    %14 = vector.shape_cast %13 : vector<1x128x384xf32> to vector<128x384xf32>
    %cst_13 = arith.constant dense<0.000000e+00> : vector<8x384xf32>
    %15 = tpu.matmul %9, %14, %cst_13 {dimension_numbers = #tpu.dot_dimension_numbers<[1], [0], [0], [1], [0, 0, 1, 1], [], []>} : vector<8x128xf32>, vector<128x384xf32>, vector<8x384xf32> -> vector<8x384xf32>
    %16 = vector.extract_strided_slice %12 {offsets = [0, 0], sizes = [8, 256], strides = [1, 1]} : vector<8x384xf32> to vector<8x256xf32>
    %17 = vector.extract_strided_slice %15 {offsets = [0, 0], sizes = [8, 256], strides = [1, 1]} : vector<8x384xf32> to vector<8x256xf32>
    %18 = arith.addf %16, %17 : vector<8x256xf32>
    %c0_14 = arith.constant 0 : index
    %c0_15 = arith.constant 0 : index
    %c0_16 = arith.constant 0 : index
    %19 = vector.load %arg5[%c0_14, %c0_15, %c0_16] : memref<2x1x256xf32, #tpu.memory_space<vmem>>, vector<1x1x256xf32>
    %20 = vector.shape_cast %19 : vector<1x1x256xf32> to vector<1x256xf32>
    %21 = vector.broadcast %20 : vector<1x256xf32> to vector<8x256xf32>
    %22 = arith.addf %18, %21 : vector<8x256xf32>
    %23 = arith.negf %22 : vector<8x256xf32>
    %24 = math.exp %23 : vector<8x256xf32>
    %cst_17 = arith.constant 1.000000e+00 : f32
    %25 = vector.broadcast %cst_17 : f32 to vector<8x256xf32>
    %26 = arith.addf %25, %24 : vector<8x256xf32>
    %27 = arith.divf %25, %26 : vector<8x256xf32>
    %28 = vector.extract_strided_slice %27 {offsets = [0, 0], sizes = [8, 128], strides = [1, 1]} : vector<8x256xf32> to vector<8x128xf32>
    %29 = vector.extract_strided_slice %27 {offsets = [0, 128], sizes = [8, 128], strides = [1, 1]} : vector<8x256xf32> to vector<8x128xf32>
    %30 = vector.extract_strided_slice %12 {offsets = [0, 256], sizes = [8, 128], strides = [1, 1]} : vector<8x384xf32> to vector<8x128xf32>
    %c0_18 = arith.constant 0 : index
    %c0_19 = arith.constant 0 : index
    %c0_20 = arith.constant 0 : index
    %31 = vector.load %arg6[%c0_18, %c0_19, %c0_20] : memref<2x1x128xf32, #tpu.memory_space<vmem>>, vector<1x1x128xf32>
    %32 = vector.shape_cast %31 : vector<1x1x128xf32> to vector<1x128xf32>
    %33 = vector.broadcast %32 : vector<1x128xf32> to vector<8x128xf32>
    %34 = arith.addf %30, %33 : vector<8x128xf32>
    %35 = vector.extract_strided_slice %15 {offsets = [0, 256], sizes = [8, 128], strides = [1, 1]} : vector<8x384xf32> to vector<8x128xf32>
    %c0_21 = arith.constant 0 : index
    %c0_22 = arith.constant 0 : index
    %c0_23 = arith.constant 0 : index
    %36 = vector.load %arg7[%c0_21, %c0_22, %c0_23] : memref<2x1x128xf32, #tpu.memory_space<vmem>>, vector<1x1x128xf32>
    %37 = vector.shape_cast %36 : vector<1x1x128xf32> to vector<1x128xf32>
    %38 = vector.broadcast %37 : vector<1x128xf32> to vector<8x128xf32>
    %39 = arith.addf %35, %38 : vector<8x128xf32>
    %40 = arith.mulf %28, %39 : vector<8x128xf32>
    %41 = arith.addf %34, %40 : vector<8x128xf32>
    %42 = math.tanh %41 : vector<8x128xf32>
    %cst_24 = arith.constant 1.000000e+00 : f32
    %43 = vector.broadcast %cst_24 : f32 to vector<8x128xf32>
    %44 = arith.subf %43, %29 : vector<8x128xf32>
    %45 = arith.mulf %44, %42 : vector<8x128xf32>
    %46 = arith.mulf %29, %9 : vector<8x128xf32>
    %47 = arith.addf %45, %46 : vector<8x128xf32>
    %c0_25 = arith.constant 0 : index
    %c0_26 = arith.constant 0 : index
    %c0_27 = arith.constant 0 : index
    %48 = vector.load %arg12[%c0_25, %c0_26, %c0_27] : memref<2x8x128xf32, #tpu.memory_space<vmem>>, vector<1x8x128xf32>
    %49 = vector.shape_cast %48 : vector<1x8x128xf32> to vector<8x128xf32>
    %50 = vector.shape_cast %47 : vector<8x128xf32> to vector<1x8x128xf32>
    tpu.vector_store %arg12[%c0_25, %c0_26, %c0_27], %50 {strides = array<i32>} : memref<2x8x128xf32, #tpu.memory_space<vmem>>, vector<1x8x128xf32>,
    %c1 = arith.constant 1 : index
    %c0_28 = arith.constant 0 : index
    %c0_29 = arith.constant 0 : index
    %51 = vector.load %arg10[%c1, %c0_28, %c0_29] : memref<2x8x128xf32, #tpu.memory_space<vmem>>, vector<1x8x128xf32>
    %52 = vector.shape_cast %51 : vector<1x8x128xf32> to vector<8x128xf32>
    %c1_30 = arith.constant 1 : index
    %c0_31 = arith.constant 0 : index
    %c0_32 = arith.constant 0 : index
    %53 = vector.load %arg3[%c1_30, %c0_31, %c0_32] : memref<2x128x384xf32, #tpu.memory_space<vmem>>, vector<1x128x384xf32>
    %54 = vector.shape_cast %53 : vector<1x128x384xf32> to vector<128x384xf32>
    %cst_33 = arith.constant dense<0.000000e+00> : vector<8x384xf32>
    %55 = tpu.matmul %47, %54, %cst_33 {dimension_numbers = #tpu.dot_dimension_numbers<[1], [0], [0], [1], [0, 0, 1, 1], [], []>} : vector<8x128xf32>, vector<128x384xf32>, vector<8x384xf32> -> vector<8x384xf32>
    %c1_34 = arith.constant 1 : index
    %c0_35 = arith.constant 0 : index
    %c0_36 = arith.constant 0 : index
    %56 = vector.load %arg4[%c1_34, %c0_35, %c0_36] : memref<2x128x384xf32, #tpu.memory_space<vmem>>, vector<1x128x384xf32>
    %57 = vector.shape_cast %56 : vector<1x128x384xf32> to vector<128x384xf32>
    %cst_37 = arith.constant dense<0.000000e+00> : vector<8x384xf32>
    %58 = tpu.matmul %52, %57, %cst_37 {dimension_numbers = #tpu.dot_dimension_numbers<[1], [0], [0], [1], [0, 0, 1, 1], [], []>} : vector<8x128xf32>, vector<128x384xf32>, vector<8x384xf32> -> vector<8x384xf32>
    %59 = vector.extract_strided_slice %55 {offsets = [0, 0], sizes = [8, 256], strides = [1, 1]} : vector<8x384xf32> to vector<8x256xf32>
    %60 = vector.extract_strided_slice %58 {offsets = [0, 0], sizes = [8, 256], strides = [1, 1]} : vector<8x384xf32> to vector<8x256xf32>
    %61 = arith.addf %59, %60 : vector<8x256xf32>
    %c1_38 = arith.constant 1 : index
    %c0_39 = arith.constant 0 : index
    %c0_40 = arith.constant 0 : index
    %62 = vector.load %arg5[%c1_38, %c0_39, %c0_40] : memref<2x1x256xf32, #tpu.memory_space<vmem>>, vector<1x1x256xf32>
    %63 = vector.shape_cast %62 : vector<1x1x256xf32> to vector<1x256xf32>
    %64 = vector.broadcast %63 : vector<1x256xf32> to vector<8x256xf32>
    %65 = arith.addf %61, %64 : vector<8x256xf32>
    %66 = arith.negf %65 : vector<8x256xf32>
    %67 = math.exp %66 : vector<8x256xf32>
    %cst_41 = arith.constant 1.000000e+00 : f32
    %68 = vector.broadcast %cst_41 : f32 to vector<8x256xf32>
    %69 = arith.addf %68, %67 : vector<8x256xf32>
    %70 = arith.divf %68, %69 : vector<8x256xf32>
    %71 = vector.extract_strided_slice %70 {offsets = [0, 0], sizes = [8, 128], strides = [1, 1]} : vector<8x256xf32> to vector<8x128xf32>
    %72 = vector.extract_strided_slice %70 {offsets = [0, 128], sizes = [8, 128], strides = [1, 1]} : vector<8x256xf32> to vector<8x128xf32>
    %73 = vector.extract_strided_slice %55 {offsets = [0, 256], sizes = [8, 128], strides = [1, 1]} : vector<8x384xf32> to vector<8x128xf32>
    %c1_42 = arith.constant 1 : index
    %c0_43 = arith.constant 0 : index
    %c0_44 = arith.constant 0 : index
    %74 = vector.load %arg6[%c1_42, %c0_43, %c0_44] : memref<2x1x128xf32, #tpu.memory_space<vmem>>, vector<1x1x128xf32>
    %75 = vector.shape_cast %74 : vector<1x1x128xf32> to vector<1x128xf32>
    %76 = vector.broadcast %75 : vector<1x128xf32> to vector<8x128xf32>
    %77 = arith.addf %73, %76 : vector<8x128xf32>
    %78 = vector.extract_strided_slice %58 {offsets = [0, 256], sizes = [8, 128], strides = [1, 1]} : vector<8x384xf32> to vector<8x128xf32>
    %c1_45 = arith.constant 1 : index
    %c0_46 = arith.constant 0 : index
    %c0_47 = arith.constant 0 : index
    %79 = vector.load %arg7[%c1_45, %c0_46, %c0_47] : memref<2x1x128xf32, #tpu.memory_space<vmem>>, vector<1x1x128xf32>
    %80 = vector.shape_cast %79 : vector<1x1x128xf32> to vector<1x128xf32>
    %81 = vector.broadcast %80 : vector<1x128xf32> to vector<8x128xf32>
    %82 = arith.addf %78, %81 : vector<8x128xf32>
    %83 = arith.mulf %71, %82 : vector<8x128xf32>
    %84 = arith.addf %77, %83 : vector<8x128xf32>
    %85 = math.tanh %84 : vector<8x128xf32>
    %cst_48 = arith.constant 1.000000e+00 : f32
    %86 = vector.broadcast %cst_48 : f32 to vector<8x128xf32>
    %87 = arith.subf %86, %72 : vector<8x128xf32>
    %88 = arith.mulf %87, %85 : vector<8x128xf32>
    %89 = arith.mulf %72, %52 : vector<8x128xf32>
    %90 = arith.addf %88, %89 : vector<8x128xf32>
    %c1_49 = arith.constant 1 : index
    %c0_50 = arith.constant 0 : index
    %c0_51 = arith.constant 0 : index
    %91 = vector.load %arg12[%c1_49, %c0_50, %c0_51] : memref<2x8x128xf32, #tpu.memory_space<vmem>>, vector<1x8x128xf32>
    %92 = vector.shape_cast %91 : vector<1x8x128xf32> to vector<8x128xf32>
    %93 = vector.shape_cast %90 : vector<8x128xf32> to vector<1x8x128xf32>
    tpu.vector_store %arg12[%c1_49, %c0_50, %c0_51], %93 {strides = array<i32>} : memref<2x8x128xf32, #tpu.memory_space<vmem>>, vector<1x8x128xf32>,
    %c0_52 = arith.constant 0 : index
    %c0_53 = arith.constant 0 : index
    %94 = vector.load %arg8[%c0_52, %c0_53] : memref<128x128xf32, #tpu.memory_space<vmem>>, vector<128x128xf32>
    %cst_54 = arith.constant dense<0.000000e+00> : vector<8x128xf32>
    %95 = tpu.matmul %90, %94, %cst_54 {dimension_numbers = #tpu.dot_dimension_numbers<[1], [0], [0], [1], [0, 0, 1, 1], [], []>} : vector<8x128xf32>, vector<128x128xf32>, vector<8x128xf32> -> vector<8x128xf32>
    %c0_55 = arith.constant 0 : index
    %c0_56 = arith.constant 0 : index
    %96 = vector.load %arg9[%c0_55, %c0_56] : memref<1x128xf32, #tpu.memory_space<vmem>>, vector<1x128xf32>
    %97 = vector.broadcast %96 : vector<1x128xf32> to vector<8x128xf32>
    %98 = arith.addf %95, %97 : vector<8x128xf32>
    %c0_57 = arith.constant 0 : index
    %c0_58 = arith.constant 0 : index
    %99 = vector.load %arg11[%c0_57, %c0_58] : memref<8x128xf32, #tpu.memory_space<vmem>>, vector<8x128xf32>
    tpu.vector_store %arg11[%c0_57, %c0_58], %98 {strides = array<i32>} : memref<8x128xf32, #tpu.memory_space<vmem>>, vector<8x128xf32>,
    return
  }
  func.func @transform_0(%arg0: i32) -> (i32, i32) {
    %c0_i32 = arith.constant 0 : i32
    %c0_i32_0 = arith.constant 0 : i32
    %c0_i32_1 = arith.constant 0 : i32
    return %c0_i32, %c0_i32_0 : i32, i32
  }
  func.func @transform_1(%arg0: i32) -> (i32, i32) {
    %c0_i32 = arith.constant 0 : i32
    %c0_i32_0 = arith.constant 0 : i32
    %c0_i32_1 = arith.constant 0 : i32
    return %c0_i32, %c0_i32_0 : i32, i32
  }
  func.func @transform_2(%arg0: i32) -> (i32, i32, i32) {
    %c0_i32 = arith.constant 0 : i32
    %c0_i32_0 = arith.constant 0 : i32
    %c0_i32_1 = arith.constant 0 : i32
    %c0_i32_2 = arith.constant 0 : i32
    return %c0_i32, %c0_i32_0, %c0_i32_1 : i32, i32, i32
  }
  func.func @transform_3(%arg0: i32) -> (i32, i32, i32) {
    %c0_i32 = arith.constant 0 : i32
    %c0_i32_0 = arith.constant 0 : i32
    %c0_i32_1 = arith.constant 0 : i32
    %c0_i32_2 = arith.constant 0 : i32
    return %c0_i32, %c0_i32_0, %c0_i32_1 : i32, i32, i32
  }
  func.func @transform_4(%arg0: i32) -> (i32, i32, i32) {
    %c0_i32 = arith.constant 0 : i32
    %c0_i32_0 = arith.constant 0 : i32
    %c0_i32_1 = arith.constant 0 : i32
    %c0_i32_2 = arith.constant 0 : i32
    return %c0_i32, %c0_i32_0, %c0_i32_1 : i32, i32, i32
  }
  func.func @transform_5(%arg0: i32) -> (i32, i32, i32) {
    %c0_i32 = arith.constant 0 : i32
    %c0_i32_0 = arith.constant 0 : i32
    %c0_i32_1 = arith.constant 0 : i32
    %c0_i32_2 = arith.constant 0 : i32
    return %c0_i32, %c0_i32_0, %c0_i32_1 : i32, i32, i32
  }
  func.func @transform_6(%arg0: i32) -> (i32, i32, i32) {
    %c0_i32 = arith.constant 0 : i32
    %c0_i32_0 = arith.constant 0 : i32
    %c0_i32_1 = arith.constant 0 : i32
    %c0_i32_2 = arith.constant 0 : i32
    return %c0_i32, %c0_i32_0, %c0_i32_1 : i32, i32, i32
  }
  func.func @transform_7(%arg0: i32) -> (i32, i32) {
    %c0_i32 = arith.constant 0 : i32
    %c0_i32_0 = arith.constant 0 : i32
    %c0_i32_1 = arith.constant 0 : i32
    return %c0_i32, %c0_i32_0 : i32, i32
  }
  func.func @transform_8(%arg0: i32) -> (i32, i32) {
    %c0_i32 = arith.constant 0 : i32
    %c0_i32_0 = arith.constant 0 : i32
    %c0_i32_1 = arith.constant 0 : i32
    return %c0_i32, %c0_i32_0 : i32, i32
  }
  func.func @transform_9(%arg0: i32) -> (i32, i32, i32) {
    %c0_i32 = arith.constant 0 : i32
    %c0_i32_0 = arith.constant 0 : i32
    %c0_i32_1 = arith.constant 0 : i32
    %c0_i32_2 = arith.constant 0 : i32
    return %c0_i32, %c0_i32_0, %c0_i32_1 : i32, i32, i32
  }
  func.func @transform_10(%arg0: i32) -> (i32, i32) {
    %c0_i32 = arith.constant 0 : i32
    %c0_i32_0 = arith.constant 0 : i32
    %c0_i32_1 = arith.constant 0 : i32
    return %c0_i32, %c0_i32_0 : i32, i32
  }
  func.func @transform_11(%arg0: i32) -> (i32, i32, i32) {
    %c0_i32 = arith.constant 0 : i32
    %c0_i32_0 = arith.constant 0 : i32
    %c0_i32_1 = arith.constant 0 : i32
    %c0_i32_2 = arith.constant 0 : i32
    return %c0_i32, %c0_i32_0, %c0_i32_1 : i32, i32, i32
  }
}

</mosaic_0001>

<llo_original>
// kernel: tpu_custom_call.1
$region0: #{tpu_custom_call.1}
  #allocation0 [shape = 'u32[]', space=smem, size = 0x4, offset = 0x4, fixed_abs, tag = 'smem constant byte address 0x4 - core index']
  #allocation1 [shape = 'u32[144,128]{1,0:T(1,128)}', space=vmem, size = 0x12000, scoped, tag = 'internal scratch']
  %s0 = inlined_call_operand.vmem [shape: s32[8,1], index: 0, kind: input, shape index: {}]
  %s1 = inlined_call_operand.hbm [shape: f32[128,128], index: 1, kind: input, shape index: {}]
  %s2 = inlined_call_operand.hbm [shape: f32[2,128,384], index: 2, kind: input, shape index: {}]
  %s3 = inlined_call_operand.hbm [shape: f32[2,128,384], index: 3, kind: input, shape index: {}]
  %s4 = inlined_call_operand.vmem [shape: f32[2,1,256], index: 4, kind: input, shape index: {}]
  %s5 = inlined_call_operand.vmem [shape: f32[2,1,128], index: 5, kind: input, shape index: {}]
  %s6 = inlined_call_operand.vmem [shape: f32[2,1,128], index: 6, kind: input, shape index: {}]
  %s7 = inlined_call_operand.hbm [shape: f32[128,128], index: 7, kind: input, shape index: {}]
  %s8 = inlined_call_operand.vmem [shape: f32[1,128], index: 8, kind: input, shape index: {}]
  %s9 = inlined_call_operand.vmem [shape: f32[2,8,128], index: 9, kind: input, shape index: {}]
  %s10 = inlined_call_operand.hbm [shape: f32[8,128], index: 10, kind: output, shape index: {0}]
  %s11 = inlined_call_operand.hbm [shape: f32[2,8,128], index: 11, kind: output, shape index: {1}]
  %12 = xla_tuple %s10, %s11
  %s13 = sld [smem:[#allocation0]]
  $region74: #{tpu_custom_call.1} parent=0
    _
  %s15 = ssub.s32 1, %s13
  %s16 = scalar_select 0, %s15, %s13
  $region1: #{tpu_custom_call.1} parent=0
    #allocation2 [shape = 'u8[65536]{0}', space=vmem, size = 0x10000, scoped, tag = 'input window, operand 1, single buffered']
    #allocation3 [shape = 's32[1]{0}', space=sflag, size = 0x4, scoped, tag = 'scoped memory for tpu_custom_call.1']
    #allocation4 [shape = 's32[1]{0}', space=sflag, size = 0x4, scoped, tag = 'scoped memory for tpu_custom_call.1']
    #allocation5 [shape = 'u8[393216]{0}', space=vmem, size = 0x60000, scoped, tag = 'input window, operand 2, single buffered']
    #allocation6 [shape = 's32[1]{0}', space=sflag, size = 0x4, scoped, tag = 'scoped memory for tpu_custom_call.1']
    #allocation7 [shape = 'u8[393216]{0}', space=vmem, size = 0x60000, scoped, tag = 'input window, operand 3, single buffered']
    #allocation8 [shape = 'u8[65536]{0}', space=vmem, size = 0x10000, scoped, tag = 'input window, operand 7, single buffered']
    #allocation9 [shape = 's32[1]{0}', space=sflag, size = 0x4, scoped, tag = 'scoped memory for tpu_custom_call.1']
    #allocation10 [shape = 'u8[4096]{0}', space=vmem, size = 0x1000, scoped, tag = 'output window, operand 0, single buffered']
    #allocation11 [shape = 'u8[8192]{0}', space=vmem, size = 0x2000, scoped, tag = 'output window, operand 1, single buffered']
    #allocation12 [shape = 's32[1]{0}', space=sflag, size = 0x4, scoped, tag = 'scoped memory for tpu_custom_call.1']
    %17 = vsyncpa [#allocation3], 0
    %18 = vsyncpa [#allocation6], 0
    %19 = vsyncpa [#allocation9], 0
    %20 = vsyncpa [#allocation4], 0
    %21 = vsyncpa [#allocation12], 0
    // Predicated region
    $region2: #{tpu_custom_call.1} parent=1 // pred_check
      _
    $region3: #{tpu_custom_call.1} parent=1 // pred_check_branch
      %23 = sbr.rel (0) target = $region5
    $region4: #{tpu_custom_call.1} parent=1 // pred_region
      _
    $region5: #{tpu_custom_call.1} parent=1 // pred_fallthru
      _
    // Predicated region
    $region6: #{tpu_custom_call.1} parent=1 // pred_check
      _
    $region7: #{tpu_custom_call.1} parent=1 // pred_check_branch
      %25 = sbr.rel (0) target = $region9
    $region8: #{tpu_custom_call.1} parent=1 // pred_region
      %s27 = ssub.s32 2048, 2048
      %28 = vsyncadd [#allocation3], %s27
      %s29 = sshll.u32 [#allocation2], 4
      %s30 = int_to_ptr.vmem [resolvable:$true] %s29
      %35 = dma.hbm_to_vmem [thread:$0]  %s1, 2048, %s30, [#allocation3], 128, 128, 8
    $region9: #{tpu_custom_call.1} parent=1 // pred_fallthru
      _
    // Predicated region
    $region10: #{tpu_custom_call.1} parent=1 // pred_check
      _
    $region11: #{tpu_custom_call.1} parent=1 // pred_check_branch
      %37 = sbr.rel (0) target = $region13
    $region12: #{tpu_custom_call.1} parent=1 // pred_region
      %s39 = ssub.s32 12288, 12288
      %40 = vsyncadd [#allocation6], %s39
      %s41 = sshll.u32 [#allocation5], 4
      %s42 = int_to_ptr.vmem [resolvable:$true] %s41
      %47 = dma.hbm_to_vmem [thread:$0]  %s2, 12288, %s42, [#allocation6], 384, 384, 24
    $region13: #{tpu_custom_call.1} parent=1 // pred_fallthru
      _
    // Predicated region
    $region14: #{tpu_custom_call.1} parent=1 // pred_check
      _
    $region15: #{tpu_custom_call.1} parent=1 // pred_check_branch
      %49 = sbr.rel (0) target = $region17
    $region16: #{tpu_custom_call.1} parent=1 // pred_region
      %s51 = ssub.s32 12288, 12288
      %52 = vsyncadd [#allocation6], %s51
      %s53 = sshll.u32 [#allocation7], 4
      %s54 = int_to_ptr.vmem [resolvable:$true] %s53
      %59 = dma.hbm_to_vmem [thread:$0]  %s3, 12288, %s54, [#allocation6], 384, 384, 24
    $region17: #{tpu_custom_call.1} parent=1 // pred_fallthru
      _
    // Predicated region
    $region18: #{tpu_custom_call.1} parent=1 // pred_check
      _
    $region19: #{tpu_custom_call.1} parent=1 // pred_check_branch
      %61 = sbr.rel (0) target = $region21
    $region20: #{tpu_custom_call.1} parent=1 // pred_region
      _
    $region21: #{tpu_custom_call.1} parent=1 // pred_fallthru
      _
    // Predicated region
    $region22: #{tpu_custom_call.1} parent=1 // pred_check
      _
    $region23: #{tpu_custom_call.1} parent=1 // pred_check_branch
      %63 = sbr.rel (0) target = $region25
    $region24: #{tpu_custom_call.1} parent=1 // pred_region
      _
    $region25: #{tpu_custom_call.1} parent=1 // pred_fallthru
      _
    // Predicated region
    $region26: #{tpu_custom_call.1} parent=1 // pred_check
      _
    $region27: #{tpu_custom_call.1} parent=1 // pred_check_branch
      %65 = sbr.rel (0) target = $region29
    $region28: #{tpu_custom_call.1} parent=1 // pred_region
      _
    $region29: #{tpu_custom_call.1} parent=1 // pred_fallthru
      _
    // Predicated region
    $region30: #{tpu_custom_call.1} parent=1 // pred_check
      _
    $region31: #{tpu_custom_call.1} parent=1 // pred_check_branch
      %67 = sbr.rel (0) target = $region33
    $region32: #{tpu_custom_call.1} parent=1 // pred_region
      %s69 = ssub.s32 2048, 2048
      %70 = vsyncadd [#allocation9], %s69
      %s71 = sshll.u32 [#allocation8], 4
      %s72 = int_to_ptr.vmem [resolvable:$true] %s71
      %77 = dma.hbm_to_vmem [thread:$0]  %s7, 2048, %s72, [#allocation9], 128, 128, 8
    $region33: #{tpu_custom_call.1} parent=1 // pred_fallthru
      _
    // Predicated region
    $region34: #{tpu_custom_call.1} parent=1 // pred_check
      _
    $region35: #{tpu_custom_call.1} parent=1 // pred_check_branch
      %79 = sbr.rel (0) target = $region37
    $region36: #{tpu_custom_call.1} parent=1 // pred_region
      _
    $region37: #{tpu_custom_call.1} parent=1 // pred_fallthru
      _
    // Predicated region
    $region38: #{tpu_custom_call.1} parent=1 // pred_check
      _
    $region39: #{tpu_custom_call.1} parent=1 // pred_check_branch
      %81 = sbr.rel (0) target = $region41
    $region40: #{tpu_custom_call.1} parent=1 // pred_region
      _
    $region41: #{tpu_custom_call.1} parent=1 // pred_fallthru
      _
    // Predicated region
    $region42: #{tpu_custom_call.1} parent=1 // pred_check
      _
    $region43: #{tpu_custom_call.1} parent=1 // pred_check_branch
      %83 = sbr.rel (0) target = $region45
    $region44: #{tpu_custom_call.1} parent=1 // pred_region
      %84 = dma.done [#allocation3], 2048
    $region45: #{tpu_custom_call.1} parent=1 // pred_fallthru
      _
    // Predicated region
    $region46: #{tpu_custom_call.1} parent=1 // pred_check
      _
    $region47: #{tpu_custom_call.1} parent=1 // pred_check_branch
      %86 = sbr.rel (0) target = $region49
    $region48: #{tpu_custom_call.1} parent=1 // pred_region
      %87 = dma.done [#allocation6], 12288
    $region49: #{tpu_custom_call.1} parent=1 // pred_fallthru
      _
    // Predicated region
    $region50: #{tpu_custom_call.1} parent=1 // pred_check
      _
    $region51: #{tpu_custom_call.1} parent=1 // pred_check_branch
      %89 = sbr.rel (0) target = $region53
    $region52: #{tpu_custom_call.1} parent=1 // pred_region
      %90 = dma.done [#allocation6], 12288
    $region53: #{tpu_custom_call.1} parent=1 // pred_fallthru
      _
    // Predicated region
    $region54: #{tpu_custom_call.1} parent=1 // pred_check
      _
    $region55: #{tpu_custom_call.1} parent=1 // pred_check_branch
      %92 = sbr.rel (0) target = $region57
    $region56: #{tpu_custom_call.1} parent=1 // pred_region
      %93 = dma.done [#allocation9], 2048
    $region57: #{tpu_custom_call.1} parent=1 // pred_fallthru
      _
    %v94 = vld [vmem:[%s0] sm:$0xff]
    %v95 = vlaneseq
    %v96 = vand.u32 %v95, 127
    %97 = vset.pattern.permute.xlu0 0
    %98 = vperm.xlu0 %97, %v94
    %v99 = vpop.permute.xlu0 %98
    %vm100 = vcmp.eq.s32.totalorder %v96, %v99
    %v101 = vsel %vm100, 1, 0
    %v102 = vcvt.s32.f32 %v101
    %v103 = vld [vmem:[#allocation2] sm:$0xff]
    %v104 = vld [vmem:[#allocation2 + $0x8] sm:$0xff]
    %v105 = vld [vmem:[#allocation2 + $0x10] sm:$0xff]
    %v106 = vld [vmem:[#allocation2 + $0x18] sm:$0xff]
    %v107 = vld [vmem:[#allocation2 + $0x20] sm:$0xff]
    %v108 = vld [vmem:[#allocation2 + $0x28] sm:$0xff]
    %v109 = vld [vmem:[#allocation2 + $0x30] sm:$0xff]
    %v110 = vld [vmem:[#allocation2 + $0x38] sm:$0xff]
    %v111 = vld [vmem:[#allocation2 + $0x40] sm:$0xff]
    %v112 = vld [vmem:[#allocation2 + $0x48] sm:$0xff]
    %v113 = vld [vmem:[#allocation2 + $0x50] sm:$0xff]
    %v114 = vld [vmem:[#allocation2 + $0x58] sm:$0xff]
    %v115 = vld [vmem:[#allocation2 + $0x60] sm:$0xff]
    %v116 = vld [vmem:[#allocation2 + $0x68] sm:$0xff]
    %v117 = vld [vmem:[#allocation2 + $0x70] sm:$0xff]
    %v118 = vld [vmem:[#allocation2 + $0x78] sm:$0xff]
    %119 = vmatprep.subr.mxu0 0.0
    %120 = vmatpush1.msra.mxu0 %v103
    %121 = vmatprep.subr.mxu0 0.0
    %122 = vmatpush1.msra.mxu0 %v104
    %123 = vmatprep.subr.mxu0 0.0
    %124 = vmatpush1.msra.mxu0 %v105
    %125 = vmatprep.subr.mxu0 0.0
    %126 = vmatpush1.msra.mxu0 %v106
    %127 = vmatprep.subr.mxu0 0.0
    %128 = vmatpush1.msra.mxu0 %v107
    %129 = vmatprep.subr.mxu0 0.0
    %130 = vmatpush1.msra.mxu0 %v108
    %131 = vmatprep.subr.mxu0 0.0
    %132 = vmatpush1.msra.mxu0 %v109
    %133 = vmatprep.subr.mxu0 0.0
    %134 = vmatpush1.msra.mxu0 %v110
    %135 = vmatprep.subr.mxu0 0.0
    %136 = vmatpush1.msra.mxu0 %v111
    %137 = vmatprep.subr.mxu0 0.0
    %138 = vmatpush1.msra.mxu0 %v112
    %139 = vmatprep.subr.mxu0 0.0
    %140 = vmatpush1.msra.mxu0 %v113
    %141 = vmatprep.subr.mxu0 0.0
    %142 = vmatpush1.msra.mxu0 %v114
    %143 = vmatprep.subr.mxu0 0.0
    %144 = vmatpush1.msra.mxu0 %v115
    %145 = vmatprep.subr.mxu0 0.0
    %146 = vmatpush1.msra.mxu0 %v116
    %147 = vmatprep.subr.mxu0 0.0
    %148 = vmatpush1.msra.mxu0 %v117
    %149 = vmatprep.subr.mxu0 0.0
    %150 = vmatpush1.msra.mxu0 %v118
    %151 = vmatprep.subr.mxu0 0.0
    %152 = vmatpush1.msra.mxu0 0.0
    %153 = vmatprep.subr.mxu0 0.0
    %154 = vmatpush1.msra.mxu0 0.0
    %155 = vmatprep.subr.mxu0 0.0
    %156 = vmatpush1.msra.mxu0 0.0
    %157 = vmatprep.subr.mxu0 0.0
    %158 = vmatpush1.msra.mxu0 0.0
    %159 = vmatprep.subr.mxu0 0.0
    %160 = vmatpush1.msra.mxu0 0.0
    %161 = vmatprep.subr.mxu0 0.0
    %162 = vmatpush1.msra.mxu0 0.0
    %163 = vmatprep.subr.mxu0 0.0
    %164 = vmatpush1.msra.mxu0 0.0
    %165 = vmatprep.subr.mxu0 0.0
    %166 = vmatpush1.msra.mxu0 0.0
    %167 = vmatprep.subr.mxu0 0.0
    %168 = vmatpush1.msra.mxu0 0.0
    %169 = vmatprep.subr.mxu0 0.0
    %170 = vmatpush1.msra.mxu0 0.0
    %171 = vmatprep.subr.mxu0 0.0
    %172 = vmatpush1.msra.mxu0 0.0
    %173 = vmatprep.subr.mxu0 0.0
    %174 = vmatpush1.msra.mxu0 0.0
    %175 = vmatprep.subr.mxu0 0.0
    %176 = vmatpush1.msra.mxu0 0.0
    %177 = vmatprep.subr.mxu0 0.0
    %178 = vmatpush1.msra.mxu0 0.0
    %179 = vmatprep.subr.mxu0 0.0
    %180 = vmatpush1.msra.mxu0 0.0
    %181 = vmatprep.subr.mxu0 0.0
    %182 = vmatpush1.msra.mxu0 0.0
    %183 = vmatprep.mubr.f32.mxu0 0.0
    %184 = vmatmul.mubr.f32.gmra.mrb[0].mxu0 %v102
    %v185 = vpop.f32.mrb[0].mxu0
    %v186 = vadd.f32 0.0, %v185
    %v187 = vpop.f32.mrb[0].mxu0
    %188 = vdwg.mxu0
    %v189 = vld [vmem:[%s9] sm:$0xff]
    %v190 = vld [vmem:[#allocation5] sm:$0xff]
    %v191 = vld [vmem:[#allocation5 + $0x8] sm:$0xff]
    %v192 = vld [vmem:[#allocation5 + $0x10] sm:$0xff]
    %v193 = vld [vmem:[#allocation5 + $0x18] sm:$0xff]
    %v194 = vld [vmem:[#allocation5 + $0x20] sm:$0xff]
    %v195 = vld [vmem:[#allocation5 + $0x28] sm:$0xff]
    %v196 = vld [vmem:[#allocation5 + $0x30] sm:$0xff]
    %v197 = vld [vmem:[#allocation5 + $0x38] sm:$0xff]
    %v198 = vld [vmem:[#allocation5 + $0x40] sm:$0xff]
    %v199 = vld [vmem:[#allocation5 + $0x48] sm:$0xff]
    %v200 = vld [vmem:[#allocation5 + $0x50] sm:$0xff]
    %v201 = vld [vmem:[#allocation5 + $0x58] sm:$0xff]
    %v202 = vld [vmem:[#allocation5 + $0x60] sm:$0xff]
    %v203 = vld [vmem:[#allocation5 + $0x68] sm:$0xff]
    %v204 = vld [vmem:[#allocation5 + $0x70] sm:$0xff]
    %v205 = vld [vmem:[#allocation5 + $0x78] sm:$0xff]
    %v206 = vld [vmem:[#allocation5 + $0x80] sm:$0xff]
    %v207 = vld [vmem:[#allocation5 + $0x88] sm:$0xff]
    %v208 = vld [vmem:[#allocation5 + $0x90] sm:$0xff]
    %v209 = vld [vmem:[#allocation5 + $0x98] sm:$0xff]
    %v210 = vld [vmem:[#allocation5 + $0xa0] sm:$0xff]
    %v211 = vld [vmem:[#allocation5 + $0xa8] sm:$0xff]
    %v212 = vld [vmem:[#allocation5 + $0xb0] sm:$0xff]
    %v213 = vld [vmem:[#allocation5 + $0xb8] sm:$0xff]
    %v214 = vld [vmem:[#allocation5 + $0xc0] sm:$0xff]
    %v215 = vld [vmem:[#allocation5 + $0xc8] sm:$0xff]
    %v216 = vld [vmem:[#allocation5 + $0xd0] sm:$0xff]
    %v217 = vld [vmem:[#allocation5 + $0xd8] sm:$0xff]
    %v218 = vld [vmem:[#allocation5 + $0xe0] sm:$0xff]
    %v219 = vld [vmem:[#allocation5 + $0xe8] sm:$0xff]
    %v220 = vld [vmem:[#allocation5 + $0xf0] sm:$0xff]
    %v221 = vld [vmem:[#allocation5 + $0xf8] sm:$0xff]
    %v222 = vld [vmem:[#allocation5 + $0x100] sm:$0xff]
    %v223 = vld [vmem:[#allocation5 + $0x108] sm:$0xff]
    %v224 = vld [vmem:[#allocation5 + $0x110] sm:$0xff]
    %v225 = vld [vmem:[#allocation5 + $0x118] sm:$0xff]
    %v226 = vld [vmem:[#allocation5 + $0x120] sm:$0xff]
    %v227 = vld [vmem:[#allocation5 + $0x128] sm:$0xff]
    %v228 = vld [vmem:[#allocation5 + $0x130] sm:$0xff]
    %v229 = vld [vmem:[#allocation5 + $0x138] sm:$0xff]
    %v230 = vld [vmem:[#allocation5 + $0x140] sm:$0xff]
    %v231 = vld [vmem:[#allocation5 + $0x148] sm:$0xff]
    %v232 = vld [vmem:[#allocation5 + $0x150] sm:$0xff]
    %v233 = vld [vmem:[#allocation5 + $0x158] sm:$0xff]
    %v234 = vld [vmem:[#allocation5 + $0x160] sm:$0xff]
    %v235 = vld [vmem:[#allocation5 + $0x168] sm:$0xff]
    %v236 = vld [vmem:[#allocation5 + $0x170] sm:$0xff]
    %v237 = vld [vmem:[#allocation5 + $0x178] sm:$0xff]
    %238 = vmatprep.subr.mxu0 %v191
    %239 = vmatpush1.msra.mxu0 %v190
    %240 = vmatprep.subr.mxu0 %v194
    %241 = vmatpush1.msra.mxu0 %v193
    %242 = vmatprep.subr.mxu0 %v197
    %243 = vmatpush1.msra.mxu0 %v196
    %244 = vmatprep.subr.mxu0 %v200
    %245 = vmatpush1.msra.mxu0 %v199
    %246 = vmatprep.subr.mxu0 %v203
    %247 = vmatpush1.msra.mxu0 %v202
    %248 = vmatprep.subr.mxu0 %v206
    %249 = vmatpush1.msra.mxu0 %v205
    %250 = vmatprep.subr.mxu0 %v209
    %251 = vmatpush1.msra.mxu0 %v208
    %252 = vmatprep.subr.mxu0 %v212
    %253 = vmatpush1.msra.mxu0 %v211
    %254 = vmatprep.subr.mxu0 %v215
    %255 = vmatpush1.msra.mxu0 %v214
    %256 = vmatprep.subr.mxu0 %v218
    %257 = vmatpush1.msra.mxu0 %v217
    %258 = vmatprep.subr.mxu0 %v221
    %259 = vmatpush1.msra.mxu0 %v220
    %260 = vmatprep.subr.mxu0 %v224
    %261 = vmatpush1.msra.mxu0 %v223
    %262 = vmatprep.subr.mxu0 %v227
    %263 = vmatpush1.msra.mxu0 %v226
    %264 = vmatprep.subr.mxu0 %v230
    %265 = vmatpush1.msra.mxu0 %v229
    %266 = vmatprep.subr.mxu0 %v233
    %267 = vmatpush1.msra.mxu0 %v232
    %268 = vmatprep.subr.mxu0 %v236
    %269 = vmatpush1.msra.mxu0 %v235
    %270 = vmatprep.subr.mxu0 0.0
    %271 = vmatpush1.msra.mxu0 0.0
    %272 = vmatprep.subr.mxu0 0.0
    %273 = vmatpush1.msra.mxu0 0.0
    %274 = vmatprep.subr.mxu0 0.0
    %275 = vmatpush1.msra.mxu0 0.0
    %276 = vmatprep.subr.mxu0 0.0
    %277 = vmatpush1.msra.mxu0 0.0
    %278 = vmatprep.subr.mxu0 0.0
    %279 = vmatpush1.msra.mxu0 0.0
    %280 = vmatprep.subr.mxu0 0.0
    %281 = vmatpush1.msra.mxu0 0.0
    %282 = vmatprep.subr.mxu0 0.0
    %283 = vmatpush1.msra.mxu0 0.0
    %284 = vmatprep.subr.mxu0 0.0
    %285 = vmatpush1.msra.mxu0 0.0
    %286 = vmatprep.subr.mxu0 0.0
    %287 = vmatpush1.msra.mxu0 0.0
    %288 = vmatprep.subr.mxu0 0.0
    %289 = vmatpush1.msra.mxu0 0.0
    %290 = vmatprep.subr.mxu0 0.0
    %291 = vmatpush1.msra.mxu0 0.0
    %292 = vmatprep.subr.mxu0 0.0
    %293 = vmatpush1.msra.mxu0 0.0
    %294 = vmatprep.subr.mxu0 0.0
    %295 = vmatpush1.msra.mxu0 0.0
    %296 = vmatprep.subr.mxu0 0.0
    %297 = vmatpush1.msra.mxu0 0.0
    %298 = vmatprep.subr.mxu0 0.0
    %299 = vmatpush1.msra.mxu0 0.0
    %300 = vmatprep.subr.mxu0 0.0
    %301 = vmatpush1.msra.mxu0 0.0
    %302 = vmatprep.mubr.f32.mxu0 0.0
    %303 = vmatmul.mubr.f32.gmra.mrb[0].mxu0 %v186
    %v304 = vpop.f32.mrb[0].mxu0
    %v305 = vadd.f32 0.0, %v304
    %v306 = vpop.f32.mrb[0].mxu0
    %v307 = vadd.f32 0.0, %v306
    %308 = vdwg.mxu0
    %309 = vmatprep.subr.mxu0 0.0
    %310 = vmatpush1.msra.mxu0 %v192
    %311 = vmatprep.subr.mxu0 0.0
    %312 = vmatpush1.msra.mxu0 %v195
    %313 = vmatprep.subr.mxu0 0.0
    %314 = vmatpush1.msra.mxu0 %v198
    %315 = vmatprep.subr.mxu0 0.0
    %316 = vmatpush1.msra.mxu0 %v201
    %317 = vmatprep.subr.mxu0 0.0
    %318 = vmatpush1.msra.mxu0 %v204
    %319 = vmatprep.subr.mxu0 0.0
    %320 = vmatpush1.msra.mxu0 %v207
    %321 = vmatprep.subr.mxu0 0.0
    %322 = vmatpush1.msra.mxu0 %v210
    %323 = vmatprep.subr.mxu0 0.0
    %324 = vmatpush1.msra.mxu0 %v213
    %325 = vmatprep.subr.mxu0 0.0
    %326 = vmatpush1.msra.mxu0 %v216
    %327 = vmatprep.subr.mxu0 0.0
    %328 = vmatpush1.msra.mxu0 %v219
    %329 = vmatprep.subr.mxu0 0.0
    %330 = vmatpush1.msra.mxu0 %v222
    %331 = vmatprep.subr.mxu0 0.0
    %332 = vmatpush1.msra.mxu0 %v225
    %333 = vmatprep.subr.mxu0 0.0
    %334 = vmatpush1.msra.mxu0 %v228
    %335 = vmatprep.subr.mxu0 0.0
    %336 = vmatpush1.msra.mxu0 %v231
    %337 = vmatprep.subr.mxu0 0.0
    %338 = vmatpush1.msra.mxu0 %v234
    %339 = vmatprep.subr.mxu0 0.0
    %340 = vmatpush1.msra.mxu0 %v237
    %341 = vmatprep.subr.mxu0 0.0
    %342 = vmatpush1.msra.mxu0 0.0
    %343 = vmatprep.subr.mxu0 0.0
    %344 = vmatpush1.msra.mxu0 0.0
    %345 = vmatprep.subr.mxu0 0.0
    %346 = vmatpush1.msra.mxu0 0.0
    %347 = vmatprep.subr.mxu0 0.0
    %348 = vmatpush1.msra.mxu0 0.0
    %349 = vmatprep.subr.mxu0 0.0
    %350 = vmatpush1.msra.mxu0 0.0
    %351 = vmatprep.subr.mxu0 0.0
    %352 = vmatpush1.msra.mxu0 0.0
    %353 = vmatprep.subr.mxu0 0.0
    %354 = vmatpush1.msra.mxu0 0.0
    %355 = vmatprep.subr.mxu0 0.0
    %356 = vmatpush1.msra.mxu0 0.0
    %357 = vmatprep.subr.mxu0 0.0
    %358 = vmatpush1.msra.mxu0 0.0
    %359 = vmatprep.subr.mxu0 0.0
    %360 = vmatpush1.msra.mxu0 0.0
    %361 = vmatprep.subr.mxu0 0.0
    %362 = vmatpush1.msra.mxu0 0.0
    %363 = vmatprep.subr.mxu0 0.0
    %364 = vmatpush1.msra.mxu0 0.0
    %365 = vmatprep.subr.mxu0 0.0
    %366 = vmatpush1.msra.mxu0 0.0
    %367 = vmatprep.subr.mxu0 0.0
    %368 = vmatpush1.msra.mxu0 0.0
    %369 = vmatprep.subr.mxu0 0.0
    %370 = vmatpush1.msra.mxu0 0.0
    %371 = vmatprep.subr.mxu0 0.0
    %372 = vmatpush1.msra.mxu0 0.0
    %373 = vmatprep.mubr.f32.mxu0 0.0
    %374 = vmatmul.mubr.f32.gmra.mrb[0].mxu0 %v186
    %v375 = vpop.f32.mrb[0].mxu0
    %v376 = vadd.f32 0.0, %v375
    %v377 = vpop.f32.mrb[0].mxu0
    %378 = vdwg.mxu0
    %v379 = vld [vmem:[#allocation7] sm:$0xff]
    %v380 = vld [vmem:[#allocation7 + $0x8] sm:$0xff]
    %v381 = vld [vmem:[#allocation7 + $0x10] sm:$0xff]
    %v382 = vld [vmem:[#allocation7 + $0x18] sm:$0xff]
    %v383 = vld [vmem:[#allocation7 + $0x20] sm:$0xff]
    %v384 = vld [vmem:[#allocation7 + $0x28] sm:$0xff]
    %v385 = vld [vmem:[#allocation7 + $0x30] sm:$0xff]
    %v386 = vld [vmem:[#allocation7 + $0x38] sm:$0xff]
    %v387 = vld [vmem:[#allocation7 + $0x40] sm:$0xff]
    %v388 = vld [vmem:[#allocation7 + $0x48] sm:$0xff]
    %v389 = vld [vmem:[#allocation7 + $0x50] sm:$0xff]
    %v390 = vld [vmem:[#allocation7 + $0x58] sm:$0xff]
    %v391 = vld [vmem:[#allocation7 + $0x60] sm:$0xff]
    %v392 = vld [vmem:[#allocation7 + $0x68] sm:$0xff]
    %v393 = vld [vmem:[#allocation7 + $0x70] sm:$0xff]
    %v394 = vld [vmem:[#allocation7 + $0x78] sm:$0xff]
    %v395 = vld [vmem:[#allocation7 + $0x80] sm:$0xff]
    %v396 = vld [vmem:[#allocation7 + $0x88] sm:$0xff]
    %v397 = vld [vmem:[#allocation7 + $0x90] sm:$0xff]
    %v398 = vld [vmem:[#allocation7 + $0x98] sm:$0xff]
    %v399 = vld [vmem:[#allocation7 + $0xa0] sm:$0xff]
    %v400 = vld [vmem:[#allocation7 + $0xa8] sm:$0xff]
    %v401 = vld [vmem:[#allocation7 + $0xb0] sm:$0xff]
    %v402 = vld [vmem:[#allocation7 + $0xb8] sm:$0xff]
    %v403 = vld [vmem:[#allocation7 + $0xc0] sm:$0xff]
    %v404 = vld [vmem:[#allocation7 + $0xc8] sm:$0xff]
    %v405 = vld [vmem:[#allocation7 + $0xd0] sm:$0xff]
    %v406 = vld [vmem:[#allocation7 + $0xd8] sm:$0xff]
    %v407 = vld [vmem:[#allocation7 + $0xe0] sm:$0xff]
    %v408 = vld [vmem:[#allocation7 + $0xe8] sm:$0xff]
    %v409 = vld [vmem:[#allocation7 + $0xf0] sm:$0xff]
    %v410 = vld [vmem:[#allocation7 + $0xf8] sm:$0xff]
    %v411 = vld [vmem:[#allocation7 + $0x100] sm:$0xff]
    %v412 = vld [vmem:[#allocation7 + $0x108] sm:$0xff]
    %v413 = vld [vmem:[#allocation7 + $0x110] sm:$0xff]
    %v414 = vld [vmem:[#allocation7 + $0x118] sm:$0xff]
    %v415 = vld [vmem:[#allocation7 + $0x120] sm:$0xff]
    %v416 = vld [vmem:[#allocation7 + $0x128] sm:$0xff]
    %v417 = vld [vmem:[#allocation7 + $0x130] sm:$0xff]
    %v418 = vld [vmem:[#allocation7 + $0x138] sm:$0xff]
    %v419 = vld [vmem:[#allocation7 + $0x140] sm:$0xff]
    %v420 = vld [vmem:[#allocation7 + $0x148] sm:$0xff]
    %v421 = vld [vmem:[#allocation7 + $0x150] sm:$0xff]
    %v422 = vld [vmem:[#allocation7 + $0x158] sm:$0xff]
    %v423 = vld [vmem:[#allocation7 + $0x160] sm:$0xff]
    %v424 = vld [vmem:[#allocation7 + $0x168] sm:$0xff]
    %v425 = vld [vmem:[#allocation7 + $0x170] sm:$0xff]
    %v426 = vld [vmem:[#allocation7 + $0x178] sm:$0xff]
    %427 = vmatprep.subr.mxu0 %v380
    %428 = vmatpush1.msra.mxu0 %v379
    %429 = vmatprep.subr.mxu0 %v383
    %430 = vmatpush1.msra.mxu0 %v382
    %431 = vmatprep.subr.mxu0 %v386
    %432 = vmatpush1.msra.mxu0 %v385
    %433 = vmatprep.subr.mxu0 %v389
    %434 = vmatpush1.msra.mxu0 %v388
    %435 = vmatprep.subr.mxu0 %v392
    %436 = vmatpush1.msra.mxu0 %v391
    %437 = vmatprep.subr.mxu0 %v395
    %438 = vmatpush1.msra.mxu0 %v394
    %439 = vmatprep.subr.mxu0 %v398
    %440 = vmatpush1.msra.mxu0 %v397
    %441 = vmatprep.subr.mxu0 %v401
    %442 = vmatpush1.msra.mxu0 %v400
    %443 = vmatprep.subr.mxu0 %v404
    %444 = vmatpush1.msra.mxu0 %v403
    %445 = vmatprep.subr.mxu0 %v407
    %446 = vmatpush1.msra.mxu0 %v406
    %447 = vmatprep.subr.mxu0 %v410
    %448 = vmatpush1.msra.mxu0 %v409
    %449 = vmatprep.subr.mxu0 %v413
    %450 = vmatpush1.msra.mxu0 %v412
    %451 = vmatprep.subr.mxu0 %v416
    %452 = vmatpush1.msra.mxu0 %v415
    %453 = vmatprep.subr.mxu0 %v419
    %454 = vmatpush1.msra.mxu0 %v418
    %455 = vmatprep.subr.mxu0 %v422
    %456 = vmatpush1.msra.mxu0 %v421
    %457 = vmatprep.subr.mxu0 %v425
    %458 = vmatpush1.msra.mxu0 %v424
    %459 = vmatprep.subr.mxu0 0.0
    %460 = vmatpush1.msra.mxu0 0.0
    %461 = vmatprep.subr.mxu0 0.0
    %462 = vmatpush1.msra.mxu0 0.0
    %463 = vmatprep.subr.mxu0 0.0
    %464 = vmatpush1.msra.mxu0 0.0
    %465 = vmatprep.subr.mxu0 0.0
    %466 = vmatpush1.msra.mxu0 0.0
    %467 = vmatprep.subr.mxu0 0.0
    %468 = vmatpush1.msra.mxu0 0.0
    %469 = vmatprep.subr.mxu0 0.0
    %470 = vmatpush1.msra.mxu0 0.0
    %471 = vmatprep.subr.mxu0 0.0
    %472 = vmatpush1.msra.mxu0 0.0
    %473 = vmatprep.subr.mxu0 0.0
    %474 = vmatpush1.msra.mxu0 0.0
    %475 = vmatprep.subr.mxu0 0.0
    %476 = vmatpush1.msra.mxu0 0.0
    %477 = vmatprep.subr.mxu0 0.0
    %478 = vmatpush1.msra.mxu0 0.0
    %479 = vmatprep.subr.mxu0 0.0
    %480 = vmatpush1.msra.mxu0 0.0
    %481 = vmatprep.subr.mxu0 0.0
    %482 = vmatpush1.msra.mxu0 0.0
    %483 = vmatprep.subr.mxu0 0.0
    %484 = vmatpush1.msra.mxu0 0.0
    %485 = vmatprep.subr.mxu0 0.0
    %486 = vmatpush1.msra.mxu0 0.0
    %487 = vmatprep.subr.mxu0 0.0
    %488 = vmatpush1.msra.mxu0 0.0
    %489 = vmatprep.subr.mxu0 0.0
    %490 = vmatpush1.msra.mxu0 0.0
    %491 = vmatprep.mubr.f32.mxu0 0.0
    %492 = vmatmul.mubr.f32.gmra.mrb[0].mxu0 %v189
    %v493 = vpop.f32.mrb[0].mxu0
    %v494 = vadd.f32 0.0, %v493
    %v495 = vpop.f32.mrb[0].mxu0
    %v496 = vadd.f32 0.0, %v495
    %497 = vdwg.mxu0
    %498 = vmatprep.subr.mxu0 0.0
    %499 = vmatpush1.msra.mxu0 %v381
    %500 = vmatprep.subr.mxu0 0.0
    %501 = vmatpush1.msra.mxu0 %v384
    %502 = vmatprep.subr.mxu0 0.0
    %503 = vmatpush1.msra.mxu0 %v387
    %504 = vmatprep.subr.mxu0 0.0
    %505 = vmatpush1.msra.mxu0 %v390
    %506 = vmatprep.subr.mxu0 0.0
    %507 = vmatpush1.msra.mxu0 %v393
    %508 = vmatprep.subr.mxu0 0.0
    %509 = vmatpush1.msra.mxu0 %v396
    %510 = vmatprep.subr.mxu0 0.0
    %511 = vmatpush1.msra.mxu0 %v399
    %512 = vmatprep.subr.mxu0 0.0
    %513 = vmatpush1.msra.mxu0 %v402
    %514 = vmatprep.subr.mxu0 0.0
    %515 = vmatpush1.msra.mxu0 %v405
    %516 = vmatprep.subr.mxu0 0.0
    %517 = vmatpush1.msra.mxu0 %v408
    %518 = vmatprep.subr.mxu0 0.0
    %519 = vmatpush1.msra.mxu0 %v411
    %520 = vmatprep.subr.mxu0 0.0
    %521 = vmatpush1.msra.mxu0 %v414
    %522 = vmatprep.subr.mxu0 0.0
    %523 = vmatpush1.msra.mxu0 %v417
    %524 = vmatprep.subr.mxu0 0.0
    %525 = vmatpush1.msra.mxu0 %v420
    %526 = vmatprep.subr.mxu0 0.0
    %527 = vmatpush1.msra.mxu0 %v423
    %528 = vmatprep.subr.mxu0 0.0
    %529 = vmatpush1.msra.mxu0 %v426
    %530 = vmatprep.subr.mxu0 0.0
    %531 = vmatpush1.msra.mxu0 0.0
    %532 = vmatprep.subr.mxu0 0.0
    %533 = vmatpush1.msra.mxu0 0.0
    %534 = vmatprep.subr.mxu0 0.0
    %535 = vmatpush1.msra.mxu0 0.0
    %536 = vmatprep.subr.mxu0 0.0
    %537 = vmatpush1.msra.mxu0 0.0
    %538 = vmatprep.subr.mxu0 0.0
    %539 = vmatpush1.msra.mxu0 0.0
    %540 = vmatprep.subr.mxu0 0.0
    %541 = vmatpush1.msra.mxu0 0.0
    %542 = vmatprep.subr.mxu0 0.0
    %543 = vmatpush1.msra.mxu0 0.0
    %544 = vmatprep.subr.mxu0 0.0
    %545 = vmatpush1.msra.mxu0 0.0
    %546 = vmatprep.subr.mxu0 0.0
    %547 = vmatpush1.msra.mxu0 0.0
    %548 = vmatprep.subr.mxu0 0.0
    %549 = vmatpush1.msra.mxu0 0.0
    %550 = vmatprep.subr.mxu0 0.0
    %551 = vmatpush1.msra.mxu0 0.0
    %552 = vmatprep.subr.mxu0 0.0
    %553 = vmatpush1.msra.mxu0 0.0
    %554 = vmatprep.subr.mxu0 0.0
    %555 = vmatpush1.msra.mxu0 0.0
    %556 = vmatprep.subr.mxu0 0.0
    %557 = vmatpush1.msra.mxu0 0.0
    %558 = vmatprep.subr.mxu0 0.0
    %559 = vmatpush1.msra.mxu0 0.0
    %560 = vmatprep.subr.mxu0 0.0
    %561 = vmatpush1.msra.mxu0 0.0
    %562 = vmatprep.mubr.f32.mxu0 0.0
    %563 = vmatmul.mubr.f32.gmra.mrb[0].mxu0 %v189
    %v564 = vpop.f32.mrb[0].mxu0
    %v565 = vadd.f32 0.0, %v564
    %v566 = vpop.f32.mrb[0].mxu0
    %567 = vdwg.mxu0
    %v568 = vadd.f32 %v305, %v494
    %v569 = vadd.f32 %v307, %v496
    %v570 = vld [vmem:[%s4] sm:$0x3]
    %v572 = vlaneseq
    %v573 = vshrl.u32 %v572, 7
    %v574 = vsub.s32 0, %v573
    %v575 = vrot.slane %v570, %v574
    %v576 = vlaneseq
    %v577 = vshrl.u32 %v576, 7
    %v578 = vsub.s32 1, %v577
    %v579 = vrot.slane %v570, %v578
    %v582 = vadd.f32 %v568, %v575
    %v583 = vadd.f32 %v569, %v579
    %v584 = vxor.u32 %v582, 2147483648
    %v585 = vxor.u32 %v583, 2147483648
    %v586 = vmul.f32 %v584, 1.442695
    %v587 = vpow.pop %v586
    %v588 = vmul.f32 %v585, 1.442695
    %v589 = vpow.pop %v588
    %v590 = vadd.f32 %v587, 1.0
    %v591 = vadd.f32 %v589, 1.0
    %v592 = vrcp.pop %v590
    %v593 = vmul.f32 1.0, %v592
    %v594 = vrcp.pop %v591
    %v595 = vmul.f32 1.0, %v594
    %v596 = vld [vmem:[%s5] sm:$0x1]
    %v598 = vlaneseq
    %v599 = vshrl.u32 %v598, 7
    %v600 = vsub.s32 0, %v599
    %v601 = vrot.slane %v596, %v600
    %v603 = vadd.f32 %v376, %v601
    %v604 = vld [vmem:[%s6] sm:$0x1]
    %v606 = vlaneseq
    %v607 = vshrl.u32 %v606, 7
    %v608 = vsub.s32 0, %v607
    %v609 = vrot.slane %v604, %v608
    %v611 = vadd.f32 %v565, %v609
    %v612 = vmul.f32 %v593, %v611
    %v613 = vadd.f32 %v603, %v612
    %v614 = vtanh.pop %v613
    %v615 = vsub.f32 1.0, %v595
    %v616 = vmul.f32 %v615, %v614
    %v617 = vmul.f32 %v595, %v189
    %v618 = vadd.f32 %v616, %v617
    %619 = vst [vmem:[#allocation11] sm:$0xff] %v618
    %s620 = scalar_lea.vmem %s9, 8
    %v621 = vld [vmem:[%s620] sm:$0xff]
    %s622 = scalar_lea.vmem [#allocation5], 384
    %v623 = vld [vmem:[%s622] sm:$0xff]
    %v624 = vld [vmem:[%s622 + $0x8] sm:$0xff]
    %v625 = vld [vmem:[%s622 + $0x10] sm:$0xff]
    %v626 = vld [vmem:[%s622 + $0x18] sm:$0xff]
    %v627 = vld [vmem:[%s622 + $0x20] sm:$0xff]
    %v628 = vld [vmem:[%s622 + $0x28] sm:$0xff]
    %v629 = vld [vmem:[%s622 + $0x30] sm:$0xff]
    %v630 = vld [vmem:[%s622 + $0x38] sm:$0xff]
    %v631 = vld [vmem:[%s622 + $0x40] sm:$0xff]
    %v632 = vld [vmem:[%s622 + $0x48] sm:$0xff]
    %v633 = vld [vmem:[%s622 + $0x50] sm:$0xff]
    %v634 = vld [vmem:[%s622 + $0x58] sm:$0xff]
    %v635 = vld [vmem:[%s622 + $0x60] sm:$0xff]
    %v636 = vld [vmem:[%s622 + $0x68] sm:$0xff]
    %v637 = vld [vmem:[%s622 + $0x70] sm:$0xff]
    %v638 = vld [vmem:[%s622 + $0x78] sm:$0xff]
    %v639 = vld [vmem:[%s622 + $0x80] sm:$0xff]
    %v640 = vld [vmem:[%s622 + $0x88] sm:$0xff]
    %v641 = vld [vmem:[%s622 + $0x90] sm:$0xff]
    %v642 = vld [vmem:[%s622 + $0x98] sm:$0xff]
    %v643 = vld [vmem:[%s622 + $0xa0] sm:$0xff]
    %v644 = vld [vmem:[%s622 + $0xa8] sm:$0xff]
    %v645 = vld [vmem:[%s622 + $0xb0] sm:$0xff]
    %v646 = vld [vmem:[%s622 + $0xb8] sm:$0xff]
    %v647 = vld [vmem:[%s622 + $0xc0] sm:$0xff]
    %v648 = vld [vmem:[%s622 + $0xc8] sm:$0xff]
    %v649 = vld [vmem:[%s622 + $0xd0] sm:$0xff]
    %v650 = vld [vmem:[%s622 + $0xd8] sm:$0xff]
    %v651 = vld [vmem:[%s622 + $0xe0] sm:$0xff]
    %v652 = vld [vmem:[%s622 + $0xe8] sm:$0xff]
    %v653 = vld [vmem:[%s622 + $0xf0] sm:$0xff]
    %v654 = vld [vmem:[%s622 + $0xf8] sm:$0xff]
    %v655 = vld [vmem:[%s622 + $0x100] sm:$0xff]
    %v656 = vld [vmem:[%s622 + $0x108] sm:$0xff]
    %v657 = vld [vmem:[%s622 + $0x110] sm:$0xff]
    %v658 = vld [vmem:[%s622 + $0x118] sm:$0xff]
    %v659 = vld [vmem:[%s622 + $0x120] sm:$0xff]
    %v660 = vld [vmem:[%s622 + $0x128] sm:$0xff]
    %v661 = vld [vmem:[%s622 + $0x130] sm:$0xff]
    %v662 = vld [vmem:[%s622 + $0x138] sm:$0xff]
    %v663 = vld [vmem:[%s622 + $0x140] sm:$0xff]
    %v664 = vld [vmem:[%s622 + $0x148] sm:$0xff]
    %v665 = vld [vmem:[%s622 + $0x150] sm:$0xff]
    %v666 = vld [vmem:[%s622 + $0x158] sm:$0xff]
    %v667 = vld [vmem:[%s622 + $0x160] sm:$0xff]
    %v668 = vld [vmem:[%s622 + $0x168] sm:$0xff]
    %v669 = vld [vmem:[%s622 + $0x170] sm:$0xff]
    %v670 = vld [vmem:[%s622 + $0x178] sm:$0xff]
    %671 = vmatprep.subr.mxu0 %v624
    %672 = vmatpush1.msra.mxu0 %v623
    %673 = vmatprep.subr.mxu0 %v627
    %674 = vmatpush1.msra.mxu0 %v626
    %675 = vmatprep.subr.mxu0 %v630
    %676 = vmatpush1.msra.mxu0 %v629
    %677 = vmatprep.subr.mxu0 %v633
    %678 = vmatpush1.msra.mxu0 %v632
    %679 = vmatprep.subr.mxu0 %v636
    %680 = vmatpush1.msra.mxu0 %v635
    %681 = vmatprep.subr.mxu0 %v639
    %682 = vmatpush1.msra.mxu0 %v638
    %683 = vmatprep.subr.mxu0 %v642
    %684 = vmatpush1.msra.mxu0 %v641
    %685 = vmatprep.subr.mxu0 %v645
    %686 = vmatpush1.msra.mxu0 %v644
    %687 = vmatprep.subr.mxu0 %v648
    %688 = vmatpush1.msra.mxu0 %v647
    %689 = vmatprep.subr.mxu0 %v651
    %690 = vmatpush1.msra.mxu0 %v650
    %691 = vmatprep.subr.mxu0 %v654
    %692 = vmatpush1.msra.mxu0 %v653
    %693 = vmatprep.subr.mxu0 %v657
    %694 = vmatpush1.msra.mxu0 %v656
    %695 = vmatprep.subr.mxu0 %v660
    %696 = vmatpush1.msra.mxu0 %v659
    %697 = vmatprep.subr.mxu0 %v663
    %698 = vmatpush1.msra.mxu0 %v662
    %699 = vmatprep.subr.mxu0 %v666
    %700 = vmatpush1.msra.mxu0 %v665
    %701 = vmatprep.subr.mxu0 %v669
    %702 = vmatpush1.msra.mxu0 %v668
    %703 = vmatprep.subr.mxu0 0.0
    %704 = vmatpush1.msra.mxu0 0.0
    %705 = vmatprep.subr.mxu0 0.0
    %706 = vmatpush1.msra.mxu0 0.0
    %707 = vmatprep.subr.mxu0 0.0
    %708 = vmatpush1.msra.mxu0 0.0
    %709 = vmatprep.subr.mxu0 0.0
    %710 = vmatpush1.msra.mxu0 0.0
    %711 = vmatprep.subr.mxu0 0.0
    %712 = vmatpush1.msra.mxu0 0.0
    %713 = vmatprep.subr.mxu0 0.0
    %714 = vmatpush1.msra.mxu0 0.0
    %715 = vmatprep.subr.mxu0 0.0
    %716 = vmatpush1.msra.mxu0 0.0
    %717 = vmatprep.subr.mxu0 0.0
    %718 = vmatpush1.msra.mxu0 0.0
    %719 = vmatprep.subr.mxu0 0.0
    %720 = vmatpush1.msra.mxu0 0.0
    %721 = vmatprep.subr.mxu0 0.0
    %722 = vmatpush1.msra.mxu0 0.0
    %723 = vmatprep.subr.mxu0 0.0
    %724 = vmatpush1.msra.mxu0 0.0
    %725 = vmatprep.subr.mxu0 0.0
    %726 = vmatpush1.msra.mxu0 0.0
    %727 = vmatprep.subr.mxu0 0.0
    %728 = vmatpush1.msra.mxu0 0.0
    %729 = vmatprep.subr.mxu0 0.0
    %730 = vmatpush1.msra.mxu0 0.0
    %731 = vmatprep.subr.mxu0 0.0
    %732 = vmatpush1.msra.mxu0 0.0
    %733 = vmatprep.subr.mxu0 0.0
    %734 = vmatpush1.msra.mxu0 0.0
    %735 = vmatprep.mubr.f32.mxu0 0.0
    %736 = vmatmul.mubr.f32.gmra.mrb[0].mxu0 %v618
    %v737 = vpop.f32.mrb[0].mxu0
    %v738 = vadd.f32 0.0, %v737
    %v739 = vpop.f32.mrb[0].mxu0
    %v740 = vadd.f32 0.0, %v739
    %741 = vdwg.mxu0
    %742 = vmatprep.subr.mxu0 0.0
    %743 = vmatpush1.msra.mxu0 %v625
    %744 = vmatprep.subr.mxu0 0.0
    %745 = vmatpush1.msra.mxu0 %v628
    %746 = vmatprep.subr.mxu0 0.0
    %747 = vmatpush1.msra.mxu0 %v631
    %748 = vmatprep.subr.mxu0 0.0
    %749 = vmatpush1.msra.mxu0 %v634
    %750 = vmatprep.subr.mxu0 0.0
    %751 = vmatpush1.msra.mxu0 %v637
    %752 = vmatprep.subr.mxu0 0.0
    %753 = vmatpush1.msra.mxu0 %v640
    %754 = vmatprep.subr.mxu0 0.0
    %755 = vmatpush1.msra.mxu0 %v643
    %756 = vmatprep.subr.mxu0 0.0
    %757 = vmatpush1.msra.mxu0 %v646
    %758 = vmatprep.subr.mxu0 0.0
    %759 = vmatpush1.msra.mxu0 %v649
    %760 = vmatprep.subr.mxu0 0.0
    %761 = vmatpush1.msra.mxu0 %v652
    %762 = vmatprep.subr.mxu0 0.0
    %763 = vmatpush1.msra.mxu0 %v655
    %764 = vmatprep.subr.mxu0 0.0
    %765 = vmatpush1.msra.mxu0 %v658
    %766 = vmatprep.subr.mxu0 0.0
    %767 = vmatpush1.msra.mxu0 %v661
    %768 = vmatprep.subr.mxu0 0.0
    %769 = vmatpush1.msra.mxu0 %v664
    %770 = vmatprep.subr.mxu0 0.0
    %771 = vmatpush1.msra.mxu0 %v667
    %772 = vmatprep.subr.mxu0 0.0
    %773 = vmatpush1.msra.mxu0 %v670
    %774 = vmatprep.subr.mxu0 0.0
    %775 = vmatpush1.msra.mxu0 0.0
    %776 = vmatprep.subr.mxu0 0.0
    %777 = vmatpush1.msra.mxu0 0.0
    %778 = vmatprep.subr.mxu0 0.0
    %779 = vmatpush1.msra.mxu0 0.0
    %780 = vmatprep.subr.mxu0 0.0
    %781 = vmatpush1.msra.mxu0 0.0
    %782 = vmatprep.subr.mxu0 0.0
    %783 = vmatpush1.msra.mxu0 0.0
    %784 = vmatprep.subr.mxu0 0.0
    %785 = vmatpush1.msra.mxu0 0.0
    %786 = vmatprep.subr.mxu0 0.0
    %787 = vmatpush1.msra.mxu0 0.0
    %788 = vmatprep.subr.mxu0 0.0
    %789 = vmatpush1.msra.mxu0 0.0
    %790 = vmatprep.subr.mxu0 0.0
    %791 = vmatpush1.msra.mxu0 0.0
    %792 = vmatprep.subr.mxu0 0.0
    %793 = vmatpush1.msra.mxu0 0.0
    %794 = vmatprep.subr.mxu0 0.0
    %795 = vmatpush1.msra.mxu0 0.0
    %796 = vmatprep.subr.mxu0 0.0
    %797 = vmatpush1.msra.mxu0 0.0
    %798 = vmatprep.subr.mxu0 0.0
    %799 = vmatpush1.msra.mxu0 0.0
    %800 = vmatprep.subr.mxu0 0.0
    %801 = vmatpush1.msra.mxu0 0.0
    %802 = vmatprep.subr.mxu0 0.0
    %803 = vmatpush1.msra.mxu0 0.0
    %804 = vmatprep.subr.mxu0 0.0
    %805 = vmatpush1.msra.mxu0 0.0
    %806 = vmatprep.mubr.f32.mxu0 0.0
    %807 = vmatmul.mubr.f32.gmra.mrb[0].mxu0 %v618
    %v808 = vpop.f32.mrb[0].mxu0
    %v809 = vadd.f32 0.0, %v808
    %v810 = vpop.f32.mrb[0].mxu0
    %811 = vdwg.mxu0
    %s812 = scalar_lea.vmem [#allocation7], 384
    %v813 = vld [vmem:[%s812] sm:$0xff]
    %v814 = vld [vmem:[%s812 + $0x8] sm:$0xff]
    %v815 = vld [vmem:[%s812 + $0x10] sm:$0xff]
    %v816 = vld [vmem:[%s812 + $0x18] sm:$0xff]
    %v817 = vld [vmem:[%s812 + $0x20] sm:$0xff]
    %v818 = vld [vmem:[%s812 + $0x28] sm:$0xff]
    %v819 = vld [vmem:[%s812 + $0x30] sm:$0xff]
    %v820 = vld [vmem:[%s812 + $0x38] sm:$0xff]
    %v821 = vld [vmem:[%s812 + $0x40] sm:$0xff]
    %v822 = vld [vmem:[%s812 + $0x48] sm:$0xff]
    %v823 = vld [vmem:[%s812 + $0x50] sm:$0xff]
    %v824 = vld [vmem:[%s812 + $0x58] sm:$0xff]
    %v825 = vld [vmem:[%s812 + $0x60] sm:$0xff]
    %v826 = vld [vmem:[%s812 + $0x68] sm:$0xff]
    %v827 = vld [vmem:[%s812 + $0x70] sm:$0xff]
    %v828 = vld [vmem:[%s812 + $0x78] sm:$0xff]
    %v829 = vld [vmem:[%s812 + $0x80] sm:$0xff]
    %v830 = vld [vmem:[%s812 + $0x88] sm:$0xff]
    %v831 = vld [vmem:[%s812 + $0x90] sm:$0xff]
    %v832 = vld [vmem:[%s812 + $0x98] sm:$0xff]
    %v833 = vld [vmem:[%s812 + $0xa0] sm:$0xff]
    %v834 = vld [vmem:[%s812 + $0xa8] sm:$0xff]
    %v835 = vld [vmem:[%s812 + $0xb0] sm:$0xff]
    %v836 = vld [vmem:[%s812 + $0xb8] sm:$0xff]
    %v837 = vld [vmem:[%s812 + $0xc0] sm:$0xff]
    %v838 = vld [vmem:[%s812 + $0xc8] sm:$0xff]
    %v839 = vld [vmem:[%s812 + $0xd0] sm:$0xff]
    %v840 = vld [vmem:[%s812 + $0xd8] sm:$0xff]
    %v841 = vld [vmem:[%s812 + $0xe0] sm:$0xff]
    %v842 = vld [vmem:[%s812 + $0xe8] sm:$0xff]
    %v843 = vld [vmem:[%s812 + $0xf0] sm:$0xff]
    %v844 = vld [vmem:[%s812 + $0xf8] sm:$0xff]
    %v845 = vld [vmem:[%s812 + $0x100] sm:$0xff]
    %v846 = vld [vmem:[%s812 + $0x108] sm:$0xff]
    %v847 = vld [vmem:[%s812 + $0x110] sm:$0xff]
    %v848 = vld [vmem:[%s812 + $0x118] sm:$0xff]
    %v849 = vld [vmem:[%s812 + $0x120] sm:$0xff]
    %v850 = vld [vmem:[%s812 + $0x128] sm:$0xff]
    %v851 = vld [vmem:[%s812 + $0x130] sm:$0xff]
    %v852 = vld [vmem:[%s812 + $0x138] sm:$0xff]
    %v853 = vld [vmem:[%s812 + $0x140] sm:$0xff]
    %v854 = vld [vmem:[%s812 + $0x148] sm:$0xff]
    %v855 = vld [vmem:[%s812 + $0x150] sm:$0xff]
    %v856 = vld [vmem:[%s812 + $0x158] sm:$0xff]
    %v857 = vld [vmem:[%s812 + $0x160] sm:$0xff]
    %v858 = vld [vmem:[%s812 + $0x168] sm:$0xff]
    %v859 = vld [vmem:[%s812 + $0x170] sm:$0xff]
    %v860 = vld [vmem:[%s812 + $0x178] sm:$0xff]
    %861 = vmatprep.subr.mxu0 %v814
    %862 = vmatpush1.msra.mxu0 %v813
    %863 = vmatprep.subr.mxu0 %v817
    %864 = vmatpush1.msra.mxu0 %v816
    %865 = vmatprep.subr.mxu0 %v820
    %866 = vmatpush1.msra.mxu0 %v819
    %867 = vmatprep.subr.mxu0 %v823
    %868 = vmatpush1.msra.mxu0 %v822
    %869 = vmatprep.subr.mxu0 %v826
    %870 = vmatpush1.msra.mxu0 %v825
    %871 = vmatprep.subr.mxu0 %v829
    %872 = vmatpush1.msra.mxu0 %v828
    %873 = vmatprep.subr.mxu0 %v832
    %874 = vmatpush1.msra.mxu0 %v831
    %875 = vmatprep.subr.mxu0 %v835
    %876 = vmatpush1.msra.mxu0 %v834
    %877 = vmatprep.subr.mxu0 %v838
    %878 = vmatpush1.msra.mxu0 %v837
    %879 = vmatprep.subr.mxu0 %v841
    %880 = vmatpush1.msra.mxu0 %v840
    %881 = vmatprep.subr.mxu0 %v844
    %882 = vmatpush1.msra.mxu0 %v843
    %883 = vmatprep.subr.mxu0 %v847
    %884 = vmatpush1.msra.mxu0 %v846
    %885 = vmatprep.subr.mxu0 %v850
    %886 = vmatpush1.msra.mxu0 %v849
    %887 = vmatprep.subr.mxu0 %v853
    %888 = vmatpush1.msra.mxu0 %v852
    %889 = vmatprep.subr.mxu0 %v856
    %890 = vmatpush1.msra.mxu0 %v855
    %891 = vmatprep.subr.mxu0 %v859
    %892 = vmatpush1.msra.mxu0 %v858
    %893 = vmatprep.subr.mxu0 0.0
    %894 = vmatpush1.msra.mxu0 0.0
    %895 = vmatprep.subr.mxu0 0.0
    %896 = vmatpush1.msra.mxu0 0.0
    %897 = vmatprep.subr.mxu0 0.0
    %898 = vmatpush1.msra.mxu0 0.0
    %899 = vmatprep.subr.mxu0 0.0
    %900 = vmatpush1.msra.mxu0 0.0
    %901 = vmatprep.subr.mxu0 0.0
    %902 = vmatpush1.msra.mxu0 0.0
    %903 = vmatprep.subr.mxu0 0.0
    %904 = vmatpush1.msra.mxu0 0.0
    %905 = vmatprep.subr.mxu0 0.0
    %906 = vmatpush1.msra.mxu0 0.0
    %907 = vmatprep.subr.mxu0 0.0
    %908 = vmatpush1.msra.mxu0 0.0
    %909 = vmatprep.subr.mxu0 0.0
    %910 = vmatpush1.msra.mxu0 0.0
    %911 = vmatprep.subr.mxu0 0.0
    %912 = vmatpush1.msra.mxu0 0.0
    %913 = vmatprep.subr.mxu0 0.0
    %914 = vmatpush1.msra.mxu0 0.0
    %915 = vmatprep.subr.mxu0 0.0
    %916 = vmatpush1.msra.mxu0 0.0
    %917 = vmatprep.subr.mxu0 0.0
    %918 = vmatpush1.msra.mxu0 0.0
    %919 = vmatprep.subr.mxu0 0.0
    %920 = vmatpush1.msra.mxu0 0.0
    %921 = vmatprep.subr.mxu0 0.0
    %922 = vmatpush1.msra.mxu0 0.0
    %923 = vmatprep.subr.mxu0 0.0
    %924 = vmatpush1.msra.mxu0 0.0
    %925 = vmatprep.mubr.f32.mxu0 0.0
    %926 = vmatmul.mubr.f32.gmra.mrb[0].mxu0 %v621
    %v927 = vpop.f32.mrb[0].mxu0
    %v928 = vadd.f32 0.0, %v927
    %v929 = vpop.f32.mrb[0].mxu0
    %v930 = vadd.f32 0.0, %v929
    %931 = vdwg.mxu0
    %932 = vmatprep.subr.mxu0 0.0
    %933 = vmatpush1.msra.mxu0 %v815
    %934 = vmatprep.subr.mxu0 0.0
    %935 = vmatpush1.msra.mxu0 %v818
    %936 = vmatprep.subr.mxu0 0.0
    %937 = vmatpush1.msra.mxu0 %v821
    %938 = vmatprep.subr.mxu0 0.0
    %939 = vmatpush1.msra.mxu0 %v824
    %940 = vmatprep.subr.mxu0 0.0
    %941 = vmatpush1.msra.mxu0 %v827
    %942 = vmatprep.subr.mxu0 0.0
    %943 = vmatpush1.msra.mxu0 %v830
    %944 = vmatprep.subr.mxu0 0.0
    %945 = vmatpush1.msra.mxu0 %v833
    %946 = vmatprep.subr.mxu0 0.0
    %947 = vmatpush1.msra.mxu0 %v836
    %948 = vmatprep.subr.mxu0 0.0
    %949 = vmatpush1.msra.mxu0 %v839
    %950 = vmatprep.subr.mxu0 0.0
    %951 = vmatpush1.msra.mxu0 %v842
    %952 = vmatprep.subr.mxu0 0.0
    %953 = vmatpush1.msra.mxu0 %v845
    %954 = vmatprep.subr.mxu0 0.0
    %955 = vmatpush1.msra.mxu0 %v848
    %956 = vmatprep.subr.mxu0 0.0
    %957 = vmatpush1.msra.mxu0 %v851
    %958 = vmatprep.subr.mxu0 0.0
    %959 = vmatpush1.msra.mxu0 %v854
    %960 = vmatprep.subr.mxu0 0.0
    %961 = vmatpush1.msra.mxu0 %v857
    %962 = vmatprep.subr.mxu0 0.0
    %963 = vmatpush1.msra.mxu0 %v860
    %964 = vmatprep.subr.mxu0 0.0
    %965 = vmatpush1.msra.mxu0 0.0
    %966 = vmatprep.subr.mxu0 0.0
    %967 = vmatpush1.msra.mxu0 0.0
    %968 = vmatprep.subr.mxu0 0.0
    %969 = vmatpush1.msra.mxu0 0.0
    %970 = vmatprep.subr.mxu0 0.0
    %971 = vmatpush1.msra.mxu0 0.0
    %972 = vmatprep.subr.mxu0 0.0
    %973 = vmatpush1.msra.mxu0 0.0
    %974 = vmatprep.subr.mxu0 0.0
    %975 = vmatpush1.msra.mxu0 0.0
    %976 = vmatprep.subr.mxu0 0.0
    %977 = vmatpush1.msra.mxu0 0.0
    %978 = vmatprep.subr.mxu0 0.0
    %979 = vmatpush1.msra.mxu0 0.0
    %980 = vmatprep.subr.mxu0 0.0
    %981 = vmatpush1.msra.mxu0 0.0
    %982 = vmatprep.subr.mxu0 0.0
    %983 = vmatpush1.msra.mxu0 0.0
    %984 = vmatprep.subr.mxu0 0.0
    %985 = vmatpush1.msra.mxu0 0.0
    %986 = vmatprep.subr.mxu0 0.0
    %987 = vmatpush1.msra.mxu0 0.0
    %988 = vmatprep.subr.mxu0 0.0
    %989 = vmatpush1.msra.mxu0 0.0
    %990 = vmatprep.subr.mxu0 0.0
    %991 = vmatpush1.msra.mxu0 0.0
    %992 = vmatprep.subr.mxu0 0.0
    %993 = vmatpush1.msra.mxu0 0.0
    %994 = vmatprep.subr.mxu0 0.0
    %995 = vmatpush1.msra.mxu0 0.0
    %996 = vmatprep.mubr.f32.mxu0 0.0
    %997 = vmatmul.mubr.f32.gmra.mrb[0].mxu0 %v621
    %v998 = vpop.f32.mrb[0].mxu0
    %v999 = vadd.f32 0.0, %v998
    %v1000 = vpop.f32.mrb[0].mxu0
    %1001 = vdwg.mxu0
    %v1002 = vadd.f32 %v738, %v928
    %v1003 = vadd.f32 %v740, %v930
    %s1004 = scalar_lea.vmem %s4, 2
    %v1005 = vld [vmem:[%s1004] sm:$0x3]
    %v1007 = vlaneseq
    %v1008 = vshrl.u32 %v1007, 7
    %v1009 = vsub.s32 0, %v1008
    %v1010 = vrot.slane %v1005, %v1009
    %v1011 = vlaneseq
    %v1012 = vshrl.u32 %v1011, 7
    %v1013 = vsub.s32 1, %v1012
    %v1014 = vrot.slane %v1005, %v1013
    %v1017 = vadd.f32 %v1002, %v1010
    %v1018 = vadd.f32 %v1003, %v1014
    %v1019 = vxor.u32 %v1017, 2147483648
    %v1020 = vxor.u32 %v1018, 2147483648
    %v1021 = vmul.f32 %v1019, 1.442695
    %v1022 = vpow.pop %v1021
    %v1023 = vmul.f32 %v1020, 1.442695
    %v1024 = vpow.pop %v1023
    %v1025 = vadd.f32 %v1022, 1.0
    %v1026 = vadd.f32 %v1024, 1.0
    %v1027 = vrcp.pop %v1025
    %v1028 = vmul.f32 1.0, %v1027
    %v1029 = vrcp.pop %v1026
    %v1030 = vmul.f32 1.0, %v1029
    %s1031 = scalar_lea.vmem %s5, 1
    %v1032 = vld [vmem:[%s1031] sm:$0x1]
    %v1034 = vlaneseq
    %v1035 = vshrl.u32 %v1034, 7
    %v1036 = vsub.s32 0, %v1035
    %v1037 = vrot.slane %v1032, %v1036
    %v1039 = vadd.f32 %v809, %v1037
    %s1040 = scalar_lea.vmem %s6, 1
    %v1041 = vld [vmem:[%s1040] sm:$0x1]
    %v1043 = vlaneseq
    %v1044 = vshrl.u32 %v1043, 7
    %v1045 = vsub.s32 0, %v1044
    %v1046 = vrot.slane %v1041, %v1045
    %v1048 = vadd.f32 %v999, %v1046
    %v1049 = vmul.f32 %v1028, %v1048
    %v1050 = vadd.f32 %v1039, %v1049
    %v1051 = vtanh.pop %v1050
    %v1052 = vsub.f32 1.0, %v1030
    %v1053 = vmul.f32 %v1052, %v1051
    %v1054 = vmul.f32 %v1030, %v621
    %v1055 = vadd.f32 %v1053, %v1054
    %s1056 = scalar_lea.vmem [#allocation11], 8
    %1057 = vst [vmem:[%s1056] sm:$0xff] %v1055
    %v1058 = vld [vmem:[#allocation8] sm:$0xff]
    %v1059 = vld [vmem:[#allocation8 + $0x8] sm:$0xff]
    %v1060 = vld [vmem:[#allocation8 + $0x10] sm:$0xff]
    %v1061 = vld [vmem:[#allocation8 + $0x18] sm:$0xff]
    %v1062 = vld [vmem:[#allocation8 + $0x20] sm:$0xff]
    %v1063 = vld [vmem:[#allocation8 + $0x28] sm:$0xff]
    %v1064 = vld [vmem:[#allocation8 + $0x30] sm:$0xff]
    %v1065 = vld [vmem:[#allocation8 + $0x38] sm:$0xff]
    %v1066 = vld [vmem:[#allocation8 + $0x40] sm:$0xff]
    %v1067 = vld [vmem:[#allocation8 + $0x48] sm:$0xff]
    %v1068 = vld [vmem:[#allocation8 + $0x50] sm:$0xff]
    %v1069 = vld [vmem:[#allocation8 + $0x58] sm:$0xff]
    %v1070 = vld [vmem:[#allocation8 + $0x60] sm:$0xff]
    %v1071 = vld [vmem:[#allocation8 + $0x68] sm:$0xff]
    %v1072 = vld [vmem:[#allocation8 + $0x70] sm:$0xff]
    %v1073 = vld [vmem:[#allocation8 + $0x78] sm:$0xff]
    %v1074 = vld [vmem:[%s8] sm:$0x1]
    %v1076 = vlaneseq
    %v1077 = vshrl.u32 %v1076, 7
    %v1078 = vsub.s32 0, %v1077
    %v1079 = vrot.slane %v1074, %v1078
    %1081 = vmatprep.subr.mxu0 0.0
    %1082 = vmatpush1.msra.mxu0 %v1058
    %1083 = vmatprep.subr.mxu0 0.0
    %1084 = vmatpush1.msra.mxu0 %v1059
    %1085 = vmatprep.subr.mxu0 0.0
    %1086 = vmatpush1.msra.mxu0 %v1060
    %1087 = vmatprep.subr.mxu0 0.0
    %1088 = vmatpush1.msra.mxu0 %v1061
    %1089 = vmatprep.subr.mxu0 0.0
    %1090 = vmatpush1.msra.mxu0 %v1062
    %1091 = vmatprep.subr.mxu0 0.0
    %1092 = vmatpush1.msra.mxu0 %v1063
    %1093 = vmatprep.subr.mxu0 0.0
    %1094 = vmatpush1.msra.mxu0 %v1064
    %1095 = vmatprep.subr.mxu0 0.0
    %1096 = vmatpush1.msra.mxu0 %v1065
    %1097 = vmatprep.subr.mxu0 0.0
    %1098 = vmatpush1.msra.mxu0 %v1066
    %1099 = vmatprep.subr.mxu0 0.0
    %1100 = vmatpush1.msra.mxu0 %v1067
    %1101 = vmatprep.subr.mxu0 0.0
    %1102 = vmatpush1.msra.mxu0 %v1068
    %1103 = vmatprep.subr.mxu0 0.0
    %1104 = vmatpush1.msra.mxu0 %v1069
    %1105 = vmatprep.subr.mxu0 0.0
    %1106 = vmatpush1.msra.mxu0 %v1070
    %1107 = vmatprep.subr.mxu0 0.0
    %1108 = vmatpush1.msra.mxu0 %v1071
    %1109 = vmatprep.subr.mxu0 0.0
    %1110 = vmatpush1.msra.mxu0 %v1072
    %1111 = vmatprep.subr.mxu0 0.0
    %1112 = vmatpush1.msra.mxu0 %v1073
    %1113 = vmatprep.subr.mxu0 0.0
    %1114 = vmatpush1.msra.mxu0 0.0
    %1115 = vmatprep.subr.mxu0 0.0
    %1116 = vmatpush1.msra.mxu0 0.0
    %1117 = vmatprep.subr.mxu0 0.0
    %1118 = vmatpush1.msra.mxu0 0.0
    %1119 = vmatprep.subr.mxu0 0.0
    %1120 = vmatpush1.msra.mxu0 0.0
    %1121 = vmatprep.subr.mxu0 0.0
    %1122 = vmatpush1.msra.mxu0 0.0
    %1123 = vmatprep.subr.mxu0 0.0
    %1124 = vmatpush1.msra.mxu0 0.0
    %1125 = vmatprep.subr.mxu0 0.0
    %1126 = vmatpush1.msra.mxu0 0.0
    %1127 = vmatprep.subr.mxu0 0.0
    %1128 = vmatpush1.msra.mxu0 0.0
    %1129 = vmatprep.subr.mxu0 0.0
    %1130 = vmatpush1.msra.mxu0 0.0
    %1131 = vmatprep.subr.mxu0 0.0
    %1132 = vmatpush1.msra.mxu0 0.0
    %1133 = vmatprep.subr.mxu0 0.0
    %1134 = vmatpush1.msra.mxu0 0.0
    %1135 = vmatprep.subr.mxu0 0.0
    %1136 = vmatpush1.msra.mxu0 0.0
    %1137 = vmatprep.subr.mxu0 0.0
    %1138 = vmatpush1.msra.mxu0 0.0
    %1139 = vmatprep.subr.mxu0 0.0
    %1140 = vmatpush1.msra.mxu0 0.0
    %1141 = vmatprep.subr.mxu0 0.0
    %1142 = vmatpush1.msra.mxu0 0.0
    %1143 = vmatprep.subr.mxu0 0.0
    %1144 = vmatpush1.msra.mxu0 0.0
    %1145 = vmatprep.mubr.f32.mxu0 0.0
    %1146 = vmatmul.mubr.f32.gmra.mrb[0].mxu0 %v1055
    %v1147 = vpop.f32.mrb[0].mxu0
    %v1148 = vadd.f32 %v1079, %v1147
    %v1149 = vpop.f32.mrb[0].mxu0
    %1150 = vdwg.mxu0
    %1151 = vst [vmem:[#allocation10] sm:$0xff] %v1148
    // Predicated region
    $region58: #{tpu_custom_call.1} parent=1 // pred_check
      _
    $region59: #{tpu_custom_call.1} parent=1 // pred_check_branch
      %1153 = sbr.rel (0) target = $region61
    $region60: #{tpu_custom_call.1} parent=1 // pred_region
      %s1155 = ssub.s32 128, 128
      %1156 = vsyncadd [#allocation4], %s1155
      %s1158 = sshll.u32 [#allocation10], 4
      %s1159 = int_to_ptr.vmem [resolvable:$true] %s1158
      %1161 = dma.vmem_to_hbm [thread:$0]  %s1159, 128, %s10, [#allocation4]
    $region61: #{tpu_custom_call.1} parent=1 // pred_fallthru
      _
    // Predicated region
    $region62: #{tpu_custom_call.1} parent=1 // pred_check
      _
    $region63: #{tpu_custom_call.1} parent=1 // pred_check_branch
      %1163 = sbr.rel (0) target = $region65
    $region64: #{tpu_custom_call.1} parent=1 // pred_region
      %s1165 = ssub.s32 256, 256
      %1166 = vsyncadd [#allocation12], %s1165
      %s1167 = sshll.u32 [#allocation11], 4
      %s1168 = int_to_ptr.vmem [resolvable:$true] %s1167
      %1173 = dma.vmem_to_hbm [thread:$0]  %s1168, 256, %s11, [#allocation12], 128, 128, 8
    $region65: #{tpu_custom_call.1} parent=1 // pred_fallthru
      _
    // Predicated region
    $region66: #{tpu_custom_call.1} parent=1 // pred_check
      _
    $region67: #{tpu_custom_call.1} parent=1 // pred_check_branch
      %1175 = sbr.rel (0) target = $region69
    $region68: #{tpu_custom_call.1} parent=1 // pred_region
      %1176 = dma.done [#allocation4], 128
    $region69: #{tpu_custom_call.1} parent=1 // pred_fallthru
      _
    // Predicated region
    $region70: #{tpu_custom_call.1} parent=1 // pred_check
      _
    $region71: #{tpu_custom_call.1} parent=1 // pred_check_branch
      %1178 = sbr.rel (0) target = $region73
    $region72: #{tpu_custom_call.1} parent=1 // pred_region
      %1179 = dma.done [#allocation12], 256
    $region73: #{tpu_custom_call.1} parent=1 // pred_fallthru
      _
    %1180 = vsyncpa [#allocation3], 1
    %1181 = vsyncpa [#allocation6], 1
    %1182 = vsyncpa [#allocation9], 1
    %1183 = vsyncpa [#allocation4], 1
    %1184 = vsyncpa [#allocation12], 1

</llo_original>
